<compile_context>
chip_gen: v7x
topology: tpu7x:2x2x1
jax: 0.10.0
libtpu: 0.0.40
codegen_flags: <defaults>
</compile_context>

<pallas_src>
import jax
import jax.numpy as jnp
import numpy as np
from jax.experimental import pallas as pl
from jax.experimental.pallas import tpu as pltpu

NUM_GROUPS = 8
EPS = 1e-6


# ----------------------------- Pallas kernel --------------------------------

def _attn_block_kernel(x_ref, gmat_ref, g_ref, b_ref, wqkv_ref, bqkv_ref,
                       wp_ref, bp_ref, o_ref):
    # x_ref/o_ref: (C, HW) (batch dim squeezed); gmat: (C, C) one-hot group
    # matrix; g/b: (C, 1); wqkv: (3C, C) (q rows pre-scaled by C**-0.5);
    # bqkv: (3C, 1); wp: (C, C); bp: (C, 1).
    x = x_ref[...].astype(jnp.float32)                     # (C, HW)
    C, HW = x.shape
    cnt = float((C // NUM_GROUPS) * HW)

    # ---- GroupNorm(8): reduce over HW first, then group-reduce tiny stats ---
    sx = jnp.sum(x, axis=-1, keepdims=True)                # (C, 1)
    sxx = jnp.sum(x * x, axis=-1, keepdims=True)           # (C, 1)
    stats = jnp.concatenate([sx, sxx], axis=-1)            # (C, 2)
    gstats = jnp.dot(gmat_ref[...], stats,
                     preferred_element_type=jnp.float32)   # (C, 2) group sums
    mean = gstats[:, 0:1] / cnt                            # (C, 1) per-group
    var = jnp.maximum(gstats[:, 1:2] / cnt - mean * mean, 0.0)
    rstd = jax.lax.rsqrt(var + EPS)
    h = (x - mean) * rstd * g_ref[...] + b_ref[...]        # (C, HW)

    # ---- q, k, v: three 1x1 convs as one stacked channel matmul -------------
    qkv = (jnp.dot(wqkv_ref[...], h, preferred_element_type=jnp.float32)
           + bqkv_ref[...])                                 # (3C, HW)
    q = qkv[0:C, :]            # already scaled by C**-0.5 (folded into wqkv)
    k = qkv[C:2 * C, :]
    v = qkv[2 * C:3 * C, :]

    # ---- attention over HW positions (transposes only on (C,HW) operands) ---
    # scores[i, j] = sum_c q[c, i] * k[c, j]
    scores = jax.lax.dot_general(q, k, (((0,), (0,)), ((), ())),
                                 preferred_element_type=jnp.float32)  # (HW, HW)
    m = jnp.max(scores, axis=-1, keepdims=True)
    e = jnp.exp(scores - m)                                 # unnormalized
    l = jnp.sum(e, axis=-1, keepdims=True)                  # (HW, 1)
    # h_u[i, c] = sum_j e[i, j] * v[c, j]
    h_u = jax.lax.dot_general(e, v, (((1,), (1,)), ((), ())),
                              preferred_element_type=jnp.float32)     # (HW, C)
    # Deferred softmax normalization (EUP approx reciprocal, C*HW mults).
    h_n = h_u * pl.reciprocal(l, approx=True)               # (HW, C)

    # ---- output projection + residual ---------------------------------------
    # out[c, i] = sum_c' wp[c, c'] * h_n[i, c']  + bp[c]
    out = (jax.lax.dot_general(wp_ref[...], h_n, (((1,), (1,)), ((), ())),
                               preferred_element_type=jnp.float32)
           + bp_ref[...])                                    # (C, HW)
    o_ref[...] = (x + out).astype(o_ref.dtype)


# ------------------------------- wrapper -------------------------------------

def attn_block_forward(params, x):
    N, C, H, W = x.shape
    HW = H * W
    cpg = C // NUM_GROUPS
    x_f = x.reshape(N, C, HW)

    # Fold the 1/sqrt(C) attention scale into the q weights & bias (free).
    scale = jnp.float32(C) ** jnp.float32(-0.5)
    w_qkv = jnp.concatenate([params["q_w"].reshape(C, C) * scale,
                             params["k_w"].reshape(C, C),
                             params["v_w"].reshape(C, C)], axis=0)     # (3C, C)
    b_qkv = jnp.concatenate([params["q_b"] * scale, params["k_b"],
                             params["v_b"]]).reshape(3 * C, 1)
    w_p = params["proj_w"].reshape(C, C)
    b_p = params["proj_b"].reshape(C, 1)
    gamma = params["norm_w"].reshape(C, 1)
    beta = params["norm_b"].reshape(C, 1)

    # One-hot "same group" matrix, built once here (not per grid step).
    gidx = jnp.arange(C, dtype=jnp.int32) // cpg
    gmat = (gidx[:, None] == gidx[None, :]).astype(jnp.float32)        # (C, C)

    # Explicit scoped-VMEM budget sized to actual per-step usage (+headroom).
    f32b = 4
    est = f32b * (
        4 * C * HW                       # double-buffered x-in + out blocks
        + 2 * (5 * C * C + 8 * C)        # weight / aux operands
        + 4 * C * HW                     # h + qkv
        + 2 * HW * HW                    # scores + e
        + 2 * C * HW                     # h_u/h_n + out
    )
    vmem_limit = int(min(max(2 * est, 16 * 1024 * 1024), 64 * 1024 * 1024))

    out = pl.pallas_call(
        _attn_block_kernel,
        out_shape=jax.ShapeDtypeStruct((N, C, HW), x.dtype),
        grid=(N,),
        in_specs=[
            pl.BlockSpec((None, C, HW), lambda n: (n, 0, 0)),   # x (squeezed)
            pl.BlockSpec((C, C), lambda n: (0, 0)),             # gmat
            pl.BlockSpec((C, 1), lambda n: (0, 0)),             # gamma
            pl.BlockSpec((C, 1), lambda n: (0, 0)),             # beta
            pl.BlockSpec((3 * C, C), lambda n: (0, 0)),         # wqkv
            pl.BlockSpec((3 * C, 1), lambda n: (0, 0)),         # bqkv
            pl.BlockSpec((C, C), lambda n: (0, 0)),             # wp
            pl.BlockSpec((C, 1), lambda n: (0, 0)),             # bp
        ],
        out_specs=pl.BlockSpec((None, C, HW), lambda n: (n, 0, 0)),
        input_output_aliases={0: 0},                             # donate x
        compiler_params=pltpu.CompilerParams(
            dimension_semantics=("parallel",),
            vmem_limit_bytes=vmem_limit),
    )(x_f, gmat, gamma, beta, w_qkv, b_qkv, w_p, b_p)
    return out.reshape(N, C, H, W)


# --------------------------- pure-JAX reference -------------------------------

def ref_forward(params, x):
    N, C, H, W = x.shape
    xr = x.reshape(N, NUM_GROUPS, C // NUM_GROUPS, H, W)
    mu = xr.mean(axis=(2, 3, 4), keepdims=True)
    var = ((xr - mu) ** 2).mean(axis=(2, 3, 4), keepdims=True)
    hn = ((xr - mu) / jnp.sqrt(var + EPS)).reshape(N, C, H, W)
    hn = hn * params["norm_w"].reshape(1, C, 1, 1) + params["norm_b"].reshape(1, C, 1, 1)

    hp = jax.lax.Precision.HIGHEST

    def conv1x1(t, w, b):
        y = jnp.einsum('oi,nihw->nohw', w.reshape(C, C), t, precision=hp)
        return y + b.reshape(1, C, 1, 1)

    q = conv1x1(hn, params["q_w"], params["q_b"]).reshape(N, C, H * W)
    k = conv1x1(hn, params["k_w"], params["k_b"]).reshape(N, C, H * W)
    v = conv1x1(hn, params["v_w"], params["v_b"]).reshape(N, C, H * W)
    scores = jnp.einsum('nci,ncj->nij', q, k, precision=hp) * (C ** -0.5)
    p = jax.nn.softmax(scores, axis=-1)
    h_att = jnp.einsum('ncj,nij->nci', v, p, precision=hp).reshape(N, C, H, W)
    out = conv1x1(h_att, params["proj_w"], params["proj_b"])
    return x + out


# ---------------------------------- main --------------------------------------

if __name__ == "__main__":
    N, C, H, W = 2, 16, 16, 16

    key = jax.random.PRNGKey(0)
    ks = jax.random.split(key, 11)
    params = {
        "norm_w": 1.0 + 0.1 * jax.random.normal(ks[0], (C,), jnp.float32),
        "norm_b": 0.1 * jax.random.normal(ks[1], (C,), jnp.float32),
        "q_w": 0.1 * jax.random.normal(ks[2], (C, C, 1, 1), jnp.float32),
        "q_b": 0.1 * jax.random.normal(ks[3], (C,), jnp.float32),
        "k_w": 0.1 * jax.random.normal(ks[4], (C, C, 1, 1), jnp.float32),
        "k_b": 0.1 * jax.random.normal(ks[5], (C,), jnp.float32),
        "v_w": 0.1 * jax.random.normal(ks[6], (C, C, 1, 1), jnp.float32),
        "v_b": 0.1 * jax.random.normal(ks[7], (C,), jnp.float32),
        "proj_w": 0.1 * jax.random.normal(ks[8], (C, C, 1, 1), jnp.float32),
        "proj_b": 0.1 * jax.random.normal(ks[9], (C,), jnp.float32),
    }
    x = jax.random.normal(ks[10], (N, C, H, W), jnp.float32)

    fwd = jax.jit(attn_block_forward)
    out = jax.block_until_ready(fwd(params, x))

    ref = ref_forward(params, x)
    np.testing.assert_allclose(np.asarray(out), np.asarray(ref),
                               rtol=5e-3, atol=5e-3)

    print("KERNEL_OK")
</pallas_src>

<mosaic_0001>
module attributes {stable_mosaic.version = 11 : i64} {
  func.func @_attn_block_kernel(%arg0: i32, %arg1: memref<1x16x256xf32, #tpu.memory_space<vmem>>, %arg2: memref<16x16xf32, #tpu.memory_space<vmem>>, %arg3: memref<16x1xf32, #tpu.memory_space<vmem>>, %arg4: memref<16x1xf32, #tpu.memory_space<vmem>>, %arg5: memref<48x16xf32, #tpu.memory_space<vmem>>, %arg6: memref<48x1xf32, #tpu.memory_space<vmem>>, %arg7: memref<16x16xf32, #tpu.memory_space<vmem>>, %arg8: memref<16x1xf32, #tpu.memory_space<vmem>>, %arg9: memref<1x16x256xf32, #tpu.memory_space<vmem>>) attributes {dimension_semantics = [#tpu.dimension_semantics<parallel>], iteration_bounds = array<i64: 2>, scalar_prefetch = 0 : i64, scratch_operands = 0 : i64, tpu.core_type = #tpu.core_type<tc>, window_params = [{transform_indices = @transform_0, window_bounds = array<i64: 1, 16, 256>}, {pipeline_mode = #tpu.pipeline_mode<synchronous>, transform_indices = @transform_1, window_bounds = array<i64: 16, 16>}, {pipeline_mode = #tpu.pipeline_mode<synchronous>, transform_indices = @transform_2, window_bounds = array<i64: 16, 1>}, {pipeline_mode = #tpu.pipeline_mode<synchronous>, transform_indices = @transform_3, window_bounds = array<i64: 16, 1>}, {pipeline_mode = #tpu.pipeline_mode<synchronous>, transform_indices = @transform_4, window_bounds = array<i64: 48, 16>}, {pipeline_mode = #tpu.pipeline_mode<synchronous>, transform_indices = @transform_5, window_bounds = array<i64: 48, 1>}, {pipeline_mode = #tpu.pipeline_mode<synchronous>, transform_indices = @transform_6, window_bounds = array<i64: 16, 16>}, {pipeline_mode = #tpu.pipeline_mode<synchronous>, transform_indices = @transform_7, window_bounds = array<i64: 16, 1>}, {transform_indices = @transform_8, window_bounds = array<i64: 1, 16, 256>}]} {
    %c0 = arith.constant 0 : index
    %c0_0 = arith.constant 0 : index
    %c0_1 = arith.constant 0 : index
    %0 = vector.load %arg1[%c0, %c0_0, %c0_1] : memref<1x16x256xf32, #tpu.memory_space<vmem>>, vector<1x16x256xf32>
    %1 = vector.shape_cast %0 : vector<1x16x256xf32> to vector<16x256xf32>
    %cst = arith.constant dense<0.000000e+00> : vector<16xf32>
    %2 = vector.multi_reduction <add>, %1, %cst [1] : vector<16x256xf32> to vector<16xf32>
    %3 = vector.shape_cast %2 : vector<16xf32> to vector<16x1xf32>
    %4 = arith.mulf %1, %1 : vector<16x256xf32>
    %cst_2 = arith.constant dense<0.000000e+00> : vector<16xf32>
    %5 = vector.multi_reduction <add>, %4, %cst_2 [1] : vector<16x256xf32> to vector<16xf32>
    %6 = vector.shape_cast %5 : vector<16xf32> to vector<16x1xf32>
    %7 = tpu.concatenate %3, %6 in 1 : vector<16x1xf32>, vector<16x1xf32> -> vector<16x2xf32>
    %c0_3 = arith.constant 0 : index
    %c0_4 = arith.constant 0 : index
    %8 = vector.load %arg2[%c0_3, %c0_4] : memref<16x16xf32, #tpu.memory_space<vmem>>, vector<16x16xf32>
    %cst_5 = arith.constant dense<0.000000e+00> : vector<16x2xf32>
    %9 = tpu.matmul %8, %7, %cst_5 {dimension_numbers = #tpu.dot_dimension_numbers<[1], [0], [0], [1], [0, 0, 1, 1], [], []>} : vector<16x16xf32>, vector<16x2xf32>, vector<16x2xf32> -> vector<16x2xf32>
    %10 = vector.extract_strided_slice %9 {offsets = [0, 0], sizes = [16, 1], strides = [1, 1]} : vector<16x2xf32> to vector<16x1xf32>
    %cst_6 = arith.constant 5.120000e+02 : f32
    %11 = vector.broadcast %cst_6 : f32 to vector<16x1xf32>
    %12 = arith.divf %10, %11 : vector<16x1xf32>
    %13 = vector.extract_strided_slice %9 {offsets = [0, 1], sizes = [16, 1], strides = [1, 1]} : vector<16x2xf32> to vector<16x1xf32>
    %cst_7 = arith.constant 5.120000e+02 : f32
    %14 = vector.broadcast %cst_7 : f32 to vector<16x1xf32>
    %15 = arith.divf %13, %14 : vector<16x1xf32>
    %16 = arith.mulf %12, %12 : vector<16x1xf32>
    %17 = arith.subf %15, %16 : vector<16x1xf32>
    %cst_8 = arith.constant 0.000000e+00 : f32
    %18 = vector.broadcast %cst_8 : f32 to vector<16x1xf32>
    %19 = arith.maximumf %17, %18 : vector<16x1xf32>
    %cst_9 = arith.constant 9.99999997E-7 : f32
    %20 = vector.broadcast %cst_9 : f32 to vector<16x1xf32>
    %21 = arith.addf %19, %20 : vector<16x1xf32>
    %22 = math.rsqrt %21 : vector<16x1xf32>
    %23 = vector.broadcast %12 : vector<16x1xf32> to vector<16x256xf32>
    %24 = arith.subf %1, %23 : vector<16x256xf32>
    %25 = vector.broadcast %22 : vector<16x1xf32> to vector<16x256xf32>
    %26 = arith.mulf %24, %25 : vector<16x256xf32>
    %c0_10 = arith.constant 0 : index
    %c0_11 = arith.constant 0 : index
    %27 = vector.load %arg3[%c0_10, %c0_11] : memref<16x1xf32, #tpu.memory_space<vmem>>, vector<16x1xf32>
    %28 = vector.broadcast %27 : vector<16x1xf32> to vector<16x256xf32>
    %29 = arith.mulf %26, %28 : vector<16x256xf32>
    %c0_12 = arith.constant 0 : index
    %c0_13 = arith.constant 0 : index
    %30 = vector.load %arg4[%c0_12, %c0_13] : memref<16x1xf32, #tpu.memory_space<vmem>>, vector<16x1xf32>
    %31 = vector.broadcast %30 : vector<16x1xf32> to vector<16x256xf32>
    %32 = arith.addf %29, %31 : vector<16x256xf32>
    %c0_14 = arith.constant 0 : index
    %c0_15 = arith.constant 0 : index
    %33 = vector.load %arg5[%c0_14, %c0_15] : memref<48x16xf32, #tpu.memory_space<vmem>>, vector<48x16xf32>
    %cst_16 = arith.constant dense<0.000000e+00> : vector<48x256xf32>
    %34 = tpu.matmul %33, %32, %cst_16 {dimension_numbers = #tpu.dot_dimension_numbers<[1], [0], [0], [1], [0, 0, 1, 1], [], []>} : vector<48x16xf32>, vector<16x256xf32>, vector<48x256xf32> -> vector<48x256xf32>
    %c0_17 = arith.constant 0 : index
    %c0_18 = arith.constant 0 : index
    %35 = vector.load %arg6[%c0_17, %c0_18] : memref<48x1xf32, #tpu.memory_space<vmem>>, vector<48x1xf32>
    %36 = vector.broadcast %35 : vector<48x1xf32> to vector<48x256xf32>
    %37 = arith.addf %34, %36 : vector<48x256xf32>
    %38 = vector.extract_strided_slice %37 {offsets = [0, 0], sizes = [16, 256], strides = [1, 1]} : vector<48x256xf32> to vector<16x256xf32>
    %39 = vector.extract_strided_slice %37 {offsets = [16, 0], sizes = [16, 256], strides = [1, 1]} : vector<48x256xf32> to vector<16x256xf32>
    %40 = vector.extract_strided_slice %37 {offsets = [32, 0], sizes = [16, 256], strides = [1, 1]} : vector<48x256xf32> to vector<16x256xf32>
    %cst_19 = arith.constant dense<0.000000e+00> : vector<256x256xf32>
    %41 = tpu.matmul %38, %39, %cst_19 {dimension_numbers = #tpu.dot_dimension_numbers<[0], [0], [1], [1], [0, 1, 1, 1], [], []>} : vector<16x256xf32>, vector<16x256xf32>, vector<256x256xf32> -> vector<256x256xf32>
    %cst_20 = arith.constant dense<0xFF800000> : vector<256xf32>
    %42 = vector.multi_reduction <maximumf>, %41, %cst_20 [1] : vector<256x256xf32> to vector<256xf32>
    %43 = vector.shape_cast %42 : vector<256xf32> to vector<256x1xf32>
    %44 = vector.broadcast %43 : vector<256x1xf32> to vector<256x256xf32>
    %45 = arith.subf %41, %44 : vector<256x256xf32>
    %46 = math.exp %45 : vector<256x256xf32>
    %cst_21 = arith.constant dense<0.000000e+00> : vector<256xf32>
    %47 = vector.multi_reduction <add>, %46, %cst_21 [1] : vector<256x256xf32> to vector<256xf32>
    %48 = vector.shape_cast %47 : vector<256xf32> to vector<256x1xf32>
    %cst_22 = arith.constant dense<0.000000e+00> : vector<256x16xf32>
    %49 = tpu.matmul %46, %40, %cst_22 {dimension_numbers = #tpu.dot_dimension_numbers<[1], [1], [0], [0], [0, 0, 1, 0], [], []>} : vector<256x256xf32>, vector<16x256xf32>, vector<256x16xf32> -> vector<256x16xf32>
    %50 = tpu.reciprocal %48 {approx = true} : vector<256x1xf32> -> vector<256x1xf32>
    %51 = vector.broadcast %50 : vector<256x1xf32> to vector<256x16xf32>
    %52 = arith.mulf %49, %51 : vector<256x16xf32>
    %c0_23 = arith.constant 0 : index
    %c0_24 = arith.constant 0 : index
    %53 = vector.load %arg7[%c0_23, %c0_24] : memref<16x16xf32, #tpu.memory_space<vmem>>, vector<16x16xf32>
    %cst_25 = arith.constant dense<0.000000e+00> : vector<16x256xf32>
    %54 = tpu.matmul %53, %52, %cst_25 {dimension_numbers = #tpu.dot_dimension_numbers<[1], [1], [0], [0], [0, 0, 1, 0], [], []>} : vector<16x16xf32>, vector<256x16xf32>, vector<16x256xf32> -> vector<16x256xf32>
    %c0_26 = arith.constant 0 : index
    %c0_27 = arith.constant 0 : index
    %55 = vector.load %arg8[%c0_26, %c0_27] : memref<16x1xf32, #tpu.memory_space<vmem>>, vector<16x1xf32>
    %56 = vector.broadcast %55 : vector<16x1xf32> to vector<16x256xf32>
    %57 = arith.addf %54, %56 : vector<16x256xf32>
    %58 = arith.addf %1, %57 : vector<16x256xf32>
    %c0_28 = arith.constant 0 : index
    %c0_29 = arith.constant 0 : index
    %c0_30 = arith.constant 0 : index
    %59 = vector.load %arg9[%c0_28, %c0_29, %c0_30] : memref<1x16x256xf32, #tpu.memory_space<vmem>>, vector<1x16x256xf32>
    %60 = vector.shape_cast %59 : vector<1x16x256xf32> to vector<16x256xf32>
    %61 = vector.shape_cast %58 : vector<16x256xf32> to vector<1x16x256xf32>
    tpu.vector_store %arg9[%c0_28, %c0_29, %c0_30], %61 {strides = array<i32>} : memref<1x16x256xf32, #tpu.memory_space<vmem>>, vector<1x16x256xf32>,
    return
  }
  func.func @transform_0(%arg0: i32) -> (i32, i32, i32) {
    %c0_i32 = arith.constant 0 : i32
    %c0_i32_0 = arith.constant 0 : i32
    %c0_i32_1 = arith.constant 0 : i32
    return %arg0, %c0_i32, %c0_i32_0 : i32, i32, i32
  }
  func.func @transform_1(%arg0: i32) -> (i32, i32) {
    %c0_i32 = arith.constant 0 : i32
    %c0_i32_0 = arith.constant 0 : i32
    %c0_i32_1 = arith.constant 0 : i32
    return %c0_i32, %c0_i32_0 : i32, i32
  }
  func.func @transform_2(%arg0: i32) -> (i32, i32) {
    %c0_i32 = arith.constant 0 : i32
    %c0_i32_0 = arith.constant 0 : i32
    %c0_i32_1 = arith.constant 0 : i32
    return %c0_i32, %c0_i32_0 : i32, i32
  }
  func.func @transform_3(%arg0: i32) -> (i32, i32) {
    %c0_i32 = arith.constant 0 : i32
    %c0_i32_0 = arith.constant 0 : i32
    %c0_i32_1 = arith.constant 0 : i32
    return %c0_i32, %c0_i32_0 : i32, i32
  }
  func.func @transform_4(%arg0: i32) -> (i32, i32) {
    %c0_i32 = arith.constant 0 : i32
    %c0_i32_0 = arith.constant 0 : i32
    %c0_i32_1 = arith.constant 0 : i32
    return %c0_i32, %c0_i32_0 : i32, i32
  }
  func.func @transform_5(%arg0: i32) -> (i32, i32) {
    %c0_i32 = arith.constant 0 : i32
    %c0_i32_0 = arith.constant 0 : i32
    %c0_i32_1 = arith.constant 0 : i32
    return %c0_i32, %c0_i32_0 : i32, i32
  }
  func.func @transform_6(%arg0: i32) -> (i32, i32) {
    %c0_i32 = arith.constant 0 : i32
    %c0_i32_0 = arith.constant 0 : i32
    %c0_i32_1 = arith.constant 0 : i32
    return %c0_i32, %c0_i32_0 : i32, i32
  }
  func.func @transform_7(%arg0: i32) -> (i32, i32) {
    %c0_i32 = arith.constant 0 : i32
    %c0_i32_0 = arith.constant 0 : i32
    %c0_i32_1 = arith.constant 0 : i32
    return %c0_i32, %c0_i32_0 : i32, i32
  }
  func.func @transform_8(%arg0: i32) -> (i32, i32, i32) {
    %c0_i32 = arith.constant 0 : i32
    %c0_i32_0 = arith.constant 0 : i32
    %c0_i32_1 = arith.constant 0 : i32
    return %arg0, %c0_i32, %c0_i32_0 : i32, i32, i32
  }
}

</mosaic_0001>

<llo_original>
// kernel: attn_block_forward.1
$region0: #{attn_block_forward.1}
  #allocation0 [shape = 'u32[]', space=smem, size = 0x4, offset = 0x4, fixed_abs, tag = 'smem constant byte address 0x4 - core index']
  #allocation1 [shape = 'u32[144,128]{1,0:T(1,128)}', space=vmem, size = 0x12000, scoped, tag = 'internal scratch']
  %s0 = inlined_call_operand.vmem [shape: f32[2,16,256], index: 0, kind: input, shape index: {}, may-alias: {0,8}]
  %s1 = inlined_call_operand.vmem [shape: f32[16,16], index: 1, kind: input, shape index: {}]
  %s2 = inlined_call_operand.vmem [shape: f32[16,1], index: 2, kind: input, shape index: {}]
  %s3 = inlined_call_operand.vmem [shape: f32[16,1], index: 3, kind: input, shape index: {}]
  %s4 = inlined_call_operand.vmem [shape: f32[48,16], index: 4, kind: input, shape index: {}]
  %s5 = inlined_call_operand.vmem [shape: f32[48,1], index: 5, kind: input, shape index: {}]
  %s6 = inlined_call_operand.vmem [shape: f32[16,16], index: 6, kind: input, shape index: {}]
  %s7 = inlined_call_operand.vmem [shape: f32[16,1], index: 7, kind: input, shape index: {}]
  %s8 = inlined_call_operand.vmem [shape: f32[2,16,256], index: 8, kind: output, shape index: {}, may-alias: {0,8}]
  %s9 = sld [smem:[#allocation0]]
  $region65: #{attn_block_forward.1} parent=0
    _
  %s11 = ssub.s32 1, %s9
  %s12 = scalar_select 0, %s11, %s9
  loop: start=0, step=1, limit=4
  $region2: #{attn_block_forward.1} parent=0 // loop_pre_header
    _
  $region3: #{attn_block_forward.1} parent=0 // loop_header
    %s14 = sphi 0, %s18
    %p15 = scmp.ge.s32.totalorder %s14, 4
    %s24 = sphi 0, %s26
    %s27 = sphi 0, %s24
    %s28 = sphi 0, %s27
    %s44 = sphi 0, %s28
    %s48 = sphi 0, %s48
    %s50 = sphi 0, %s48
    %s51 = sphi 0, %s50
    %s65 = sphi 0, %s51
    %s69 = sphi 0, %s69
    %s71 = sphi 0, %s69
    %s72 = sphi 0, %s71
    %s86 = sphi 0, %s72
    %s90 = sphi 0, %s90
    %s92 = sphi 0, %s90
    %s93 = sphi 0, %s92
    %s107 = sphi 0, %s93
    %s111 = sphi 0, %s111
    %s113 = sphi 0, %s111
    %s114 = sphi 0, %s113
    %s128 = sphi 0, %s114
    %s132 = sphi 0, %s132
    %s134 = sphi 0, %s132
    %s135 = sphi 0, %s134
    %s149 = sphi 0, %s135
    %s153 = sphi 0, %s153
    %s155 = sphi 0, %s153
    %s156 = sphi 0, %s155
    %s170 = sphi 0, %s156
    %s174 = sphi 0, %s174
    %s176 = sphi 0, %s174
    %s177 = sphi 0, %s176
    %s191 = sphi 0, %s177
    %s197 = sphi 0, %s199
    %s200 = sphi 0, %s197
    %s201 = sphi 0, %s200
    %s217 = sphi 0, %s201
  $region4: #{attn_block_forward.1} parent=0 // loop_header_branch
    %17 = sbr.rel (%p15) target = $region8
  $region5: #{attn_block_forward.1} parent=0 // loop_body
    %s19 = ssub.s32 %s14, 1
    %s20 = ssub.s32 %s14, 2
    %s21 = sadd.s32 %s14, 1
    %s22 = ssub.s32 %s14, %s21
    %p23 = scmp.eq.s32.totalorder %s22, 0
    %s25 = sadd.s32 %s24, 1
    %s26 = scalar_select %p23, %s24, %s25
    %p29 = pneg %p23
    %p30 = scmp.eq.s32.totalorder %s14, 1
    %p31 = por %p29, %p30
    %p32 = scmp.ne.s32.totalorder %s24, %s27
    %p33 = scmp.eq.s32.totalorder %s14, 0
    %p34 = por %p32, %p33
    %p35 = scmp.ne.s32.totalorder %s24, %s27
    %p36 = scmp.eq.s32.totalorder %s19, 1
    %p37 = por %p35, %p36
    %p38 = scmp.ne.s32.totalorder %s27, %s28
    %p39 = scmp.eq.s32.totalorder %s19, 0
    %p40 = por %p38, %p39
    %p41 = scmp.ne.s32.totalorder %s27, %s28
    %p42 = scmp.eq.s32.totalorder %s20, 1
    %p43 = por %p41, %p42
    %p45 = scmp.ne.s32.totalorder %s28, %s44
    %p46 = scmp.eq.s32.totalorder %s20, 0
    %p47 = por %p45, %p46
    %s49 = sadd.s32 %s48, 1
    %p52 = scmp.eq.s32.totalorder %s14, 1
    %p53 = scmp.ne.s32.totalorder %s48, %s50
    %p54 = scmp.eq.s32.totalorder %s14, 0
    %p55 = por %p53, %p54
    %p56 = scmp.ne.s32.totalorder %s48, %s50
    %p57 = scmp.eq.s32.totalorder %s19, 1
    %p58 = por %p56, %p57
    %p59 = scmp.ne.s32.totalorder %s50, %s51
    %p60 = scmp.eq.s32.totalorder %s19, 0
    %p61 = por %p59, %p60
    %p62 = scmp.ne.s32.totalorder %s50, %s51
    %p63 = scmp.eq.s32.totalorder %s20, 1
    %p64 = por %p62, %p63
    %p66 = scmp.ne.s32.totalorder %s51, %s65
    %p67 = scmp.eq.s32.totalorder %s20, 0
    %p68 = por %p66, %p67
    %s70 = sadd.s32 %s69, 1
    %p73 = scmp.eq.s32.totalorder %s14, 1
    %p74 = scmp.ne.s32.totalorder %s69, %s71
    %p75 = scmp.eq.s32.totalorder %s14, 0
    %p76 = por %p74, %p75
    %p77 = scmp.ne.s32.totalorder %s69, %s71
    %p78 = scmp.eq.s32.totalorder %s19, 1
    %p79 = por %p77, %p78
    %p80 = scmp.ne.s32.totalorder %s71, %s72
    %p81 = scmp.eq.s32.totalorder %s19, 0
    %p82 = por %p80, %p81
    %p83 = scmp.ne.s32.totalorder %s71, %s72
    %p84 = scmp.eq.s32.totalorder %s20, 1
    %p85 = por %p83, %p84
    %p87 = scmp.ne.s32.totalorder %s72, %s86
    %p88 = scmp.eq.s32.totalorder %s20, 0
    %p89 = por %p87, %p88
    %s91 = sadd.s32 %s90, 1
    %p94 = scmp.eq.s32.totalorder %s14, 1
    %p95 = scmp.ne.s32.totalorder %s90, %s92
    %p96 = scmp.eq.s32.totalorder %s14, 0
    %p97 = por %p95, %p96
    %p98 = scmp.ne.s32.totalorder %s90, %s92
    %p99 = scmp.eq.s32.totalorder %s19, 1
    %p100 = por %p98, %p99
    %p101 = scmp.ne.s32.totalorder %s92, %s93
    %p102 = scmp.eq.s32.totalorder %s19, 0
    %p103 = por %p101, %p102
    %p104 = scmp.ne.s32.totalorder %s92, %s93
    %p105 = scmp.eq.s32.totalorder %s20, 1
    %p106 = por %p104, %p105
    %p108 = scmp.ne.s32.totalorder %s93, %s107
    %p109 = scmp.eq.s32.totalorder %s20, 0
    %p110 = por %p108, %p109
    %s112 = sadd.s32 %s111, 1
    %p115 = scmp.eq.s32.totalorder %s14, 1
    %p116 = scmp.ne.s32.totalorder %s111, %s113
    %p117 = scmp.eq.s32.totalorder %s14, 0
    %p118 = por %p116, %p117
    %p119 = scmp.ne.s32.totalorder %s111, %s113
    %p120 = scmp.eq.s32.totalorder %s19, 1
    %p121 = por %p119, %p120
    %p122 = scmp.ne.s32.totalorder %s113, %s114
    %p123 = scmp.eq.s32.totalorder %s19, 0
    %p124 = por %p122, %p123
    %p125 = scmp.ne.s32.totalorder %s113, %s114
    %p126 = scmp.eq.s32.totalorder %s20, 1
    %p127 = por %p125, %p126
    %p129 = scmp.ne.s32.totalorder %s114, %s128
    %p130 = scmp.eq.s32.totalorder %s20, 0
    %p131 = por %p129, %p130
    %s133 = sadd.s32 %s132, 1
    %p136 = scmp.eq.s32.totalorder %s14, 1
    %p137 = scmp.ne.s32.totalorder %s132, %s134
    %p138 = scmp.eq.s32.totalorder %s14, 0
    %p139 = por %p137, %p138
    %p140 = scmp.ne.s32.totalorder %s132, %s134
    %p141 = scmp.eq.s32.totalorder %s19, 1
    %p142 = por %p140, %p141
    %p143 = scmp.ne.s32.totalorder %s134, %s135
    %p144 = scmp.eq.s32.totalorder %s19, 0
    %p145 = por %p143, %p144
    %p146 = scmp.ne.s32.totalorder %s134, %s135
    %p147 = scmp.eq.s32.totalorder %s20, 1
    %p148 = por %p146, %p147
    %p150 = scmp.ne.s32.totalorder %s135, %s149
    %p151 = scmp.eq.s32.totalorder %s20, 0
    %p152 = por %p150, %p151
    %s154 = sadd.s32 %s153, 1
    %p157 = scmp.eq.s32.totalorder %s14, 1
    %p158 = scmp.ne.s32.totalorder %s153, %s155
    %p159 = scmp.eq.s32.totalorder %s14, 0
    %p160 = por %p158, %p159
    %p161 = scmp.ne.s32.totalorder %s153, %s155
    %p162 = scmp.eq.s32.totalorder %s19, 1
    %p163 = por %p161, %p162
    %p164 = scmp.ne.s32.totalorder %s155, %s156
    %p165 = scmp.eq.s32.totalorder %s19, 0
    %p166 = por %p164, %p165
    %p167 = scmp.ne.s32.totalorder %s155, %s156
    %p168 = scmp.eq.s32.totalorder %s20, 1
    %p169 = por %p167, %p168
    %p171 = scmp.ne.s32.totalorder %s156, %s170
    %p172 = scmp.eq.s32.totalorder %s20, 0
    %p173 = por %p171, %p172
    %s175 = sadd.s32 %s174, 1
    %p178 = scmp.eq.s32.totalorder %s14, 1
    %p179 = scmp.ne.s32.totalorder %s174, %s176
    %p180 = scmp.eq.s32.totalorder %s14, 0
    %p181 = por %p179, %p180
    %p182 = scmp.ne.s32.totalorder %s174, %s176
    %p183 = scmp.eq.s32.totalorder %s19, 1
    %p184 = por %p182, %p183
    %p185 = scmp.ne.s32.totalorder %s176, %s177
    %p186 = scmp.eq.s32.totalorder %s19, 0
    %p187 = por %p185, %p186
    %p188 = scmp.ne.s32.totalorder %s176, %s177
    %p189 = scmp.eq.s32.totalorder %s20, 1
    %p190 = por %p188, %p189
    %p192 = scmp.ne.s32.totalorder %s177, %s191
    %p193 = scmp.eq.s32.totalorder %s20, 0
    %p194 = por %p192, %p193
    %s195 = ssub.s32 %s14, %s21
    %p196 = scmp.eq.s32.totalorder %s195, 0
    %s198 = sadd.s32 %s197, 1
    %s199 = scalar_select %p196, %s197, %s198
    %p202 = pneg %p196
    %p203 = scmp.eq.s32.totalorder %s14, 1
    %p204 = por %p202, %p203
    %p205 = scmp.ne.s32.totalorder %s197, %s200
    %p206 = scmp.eq.s32.totalorder %s14, 0
    %p207 = por %p205, %p206
    %p208 = scmp.ne.s32.totalorder %s197, %s200
    %p209 = scmp.eq.s32.totalorder %s19, 1
    %p210 = por %p208, %p209
    %p211 = scmp.ne.s32.totalorder %s200, %s201
    %p212 = scmp.eq.s32.totalorder %s19, 0
    %p213 = por %p211, %p212
    %p214 = scmp.ne.s32.totalorder %s200, %s201
    %p215 = scmp.eq.s32.totalorder %s20, 1
    %p216 = por %p214, %p215
    %p218 = scmp.ne.s32.totalorder %s201, %s217
    %p219 = scmp.eq.s32.totalorder %s20, 0
    %p220 = por %p218, %p219
    %p221 = scmp.le.s32.totalorder 1, %s14
    %p222 = scmp.lt.s32.totalorder %s14, 3
    %p223 = pnand %p221, %p222
    %p224 = pneg %p223
    // Predicated region
    $region9: #{attn_block_forward.1} parent=5 // pred_check
      _
    $region10: #{attn_block_forward.1} parent=5 // pred_check_branch
      %226 = sbr.rel (%p223) target = $region12
    $region11: #{attn_block_forward.1} parent=5 // pred_region
      %s227 = ssub.s32 %s14, 1
      // Predicated region
      $region13: #{attn_block_forward.1} parent=11 // pred_check
        %p228 = pneg %p61
      $region14: #{attn_block_forward.1} parent=11 // pred_check_branch
        %230 = sbr.rel (%p228) target = $region16
      $region15: #{attn_block_forward.1} parent=11 // pred_region
        _
      $region16: #{attn_block_forward.1} parent=11 // pred_fallthru
        _
      // Predicated region
      $region17: #{attn_block_forward.1} parent=11 // pred_check
        %p231 = pneg %p82
      $region18: #{attn_block_forward.1} parent=11 // pred_check_branch
        %233 = sbr.rel (%p231) target = $region20
      $region19: #{attn_block_forward.1} parent=11 // pred_region
        _
      $region20: #{attn_block_forward.1} parent=11 // pred_fallthru
        _
      // Predicated region
      $region21: #{attn_block_forward.1} parent=11 // pred_check
        %p234 = pneg %p103
      $region22: #{attn_block_forward.1} parent=11 // pred_check_branch
        %236 = sbr.rel (%p234) target = $region24
      $region23: #{attn_block_forward.1} parent=11 // pred_region
        _
      $region24: #{attn_block_forward.1} parent=11 // pred_fallthru
        _
      // Predicated region
      $region25: #{attn_block_forward.1} parent=11 // pred_check
        %p237 = pneg %p124
      $region26: #{attn_block_forward.1} parent=11 // pred_check_branch
        %239 = sbr.rel (%p237) target = $region28
      $region27: #{attn_block_forward.1} parent=11 // pred_region
        _
      $region28: #{attn_block_forward.1} parent=11 // pred_fallthru
        _
      // Predicated region
      $region29: #{attn_block_forward.1} parent=11 // pred_check
        %p240 = pneg %p145
      $region30: #{attn_block_forward.1} parent=11 // pred_check_branch
        %242 = sbr.rel (%p240) target = $region32
      $region31: #{attn_block_forward.1} parent=11 // pred_region
        _
      $region32: #{attn_block_forward.1} parent=11 // pred_fallthru
        _
      // Predicated region
      $region33: #{attn_block_forward.1} parent=11 // pred_check
        %p243 = pneg %p166
      $region34: #{attn_block_forward.1} parent=11 // pred_check_branch
        %245 = sbr.rel (%p243) target = $region36
      $region35: #{attn_block_forward.1} parent=11 // pred_region
        _
      $region36: #{attn_block_forward.1} parent=11 // pred_fallthru
        _
      // Predicated region
      $region37: #{attn_block_forward.1} parent=11 // pred_check
        %p246 = pneg %p187
      $region38: #{attn_block_forward.1} parent=11 // pred_check_branch
        %248 = sbr.rel (%p246) target = $region40
      $region39: #{attn_block_forward.1} parent=11 // pred_region
        _
      $region40: #{attn_block_forward.1} parent=11 // pred_fallthru
        _
    $region12: #{attn_block_forward.1} parent=5 // pred_fallthru
      _
    %p249 = scmp.lt.s32.totalorder %s14, 2
    // Predicated region
    $region41: #{attn_block_forward.1} parent=5 // pred_check
      %p250 = pneg %p249
    $region42: #{attn_block_forward.1} parent=5 // pred_check_branch
      %252 = sbr.rel (%p250) target = $region44
    $region43: #{attn_block_forward.1} parent=5 // pred_region
      // Predicated region
      $region45: #{attn_block_forward.1} parent=43 // pred_check
        %p253 = pneg %p34
      $region46: #{attn_block_forward.1} parent=43 // pred_check_branch
        %255 = sbr.rel (%p253) target = $region48
      $region47: #{attn_block_forward.1} parent=43 // pred_region
        %p256 = scmp.lt.s32.totalorder %s14, 1
        %s257 = scalar_select %p256, %s14, 1
        %s258 = smul.addr %s257, 4
        %s259 = smul.addr %s258, 8
        %s260 = scalar_lea.vmem %s0, %s259
      $region48: #{attn_block_forward.1} parent=43 // pred_fallthru
        _
    $region44: #{attn_block_forward.1} parent=5 // pred_fallthru
      _
    %p261 = scmp.le.s32.totalorder 1, %s14
    %p262 = scmp.lt.s32.totalorder %s14, 3
    %p263 = pnand %p261, %p262
    %p264 = pneg %p263
    // Predicated region
    $region49: #{attn_block_forward.1} parent=5 // pred_check
      _
    $region50: #{attn_block_forward.1} parent=5 // pred_check_branch
      %266 = sbr.rel (%p263) target = $region52
    $region51: #{attn_block_forward.1} parent=5 // pred_region
      %s267 = ssub.s32 %s14, 1
      %p268 = scmp.lt.s32.totalorder %s19, 1
      %s269 = scalar_select %p268, %s19, 1
      %s270 = smul.addr %s269, 4
      %s271 = smul.addr %s270, 8
      %s272 = scalar_lea.vmem %s0, %s271
      %p273 = pneg %p40
      %p274 = pneg %p37
      %p275 = pneg %p61
      %p276 = pneg %p58
      %p277 = pneg %p82
      %p278 = pneg %p79
      %p279 = pneg %p103
      %p280 = pneg %p100
      %p281 = pneg %p124
      %p282 = pneg %p121
      %p283 = pneg %p145
      %p284 = pneg %p142
      %p285 = pneg %p166
      %p286 = pneg %p163
      %p287 = pneg %p187
      %p288 = pneg %p184
      %p289 = pneg %p213
      %p290 = pneg %p210
      %p291 = scmp.lt.s32.totalorder %s19, 1
      %s292 = scalar_select %p291, %s19, 1
      %s293 = smul.addr %s292, 4
      %s294 = smul.addr %s293, 8
      %s295 = scalar_lea.vmem %s8, %s294
      %p296 = scmp.lt.s32.totalorder %s19, 1
      %s297 = scalar_select %p296, %s19, 1
      %s298 = smul.addr %s297, 4
      %s299 = smul.addr %s298, 8
      %s300 = scalar_lea.vmem %s0, %s299
      %p301 = scmp.lt.s32.totalorder %s19, 1
      %s302 = scalar_select %p301, %s19, 1
      %s303 = smul.addr %s302, 4
      %s304 = smul.addr %s303, 8
      %s305 = scalar_lea.vmem %s8, %s304
      %v306 = vld [vmem:[%s300] sm:$0xff]
      %v307 = vld [vmem:[%s300 + $0x8] sm:$0xff]
      %v308 = vld [vmem:[%s300 + $0x10] sm:$0xff]
      %v309 = vld [vmem:[%s300 + $0x18] sm:$0xff]
      %v310 = vadd.f32 %v306, %v307
      %311 = vadd.xlane.f32.xlu0 %v310
      %v312 = vpop.xlane.xlu0 %311
      %v313 = vadd.f32 %v308, %v309
      %314 = vadd.xlane.f32.xlu0 %v313
      %v315 = vpop.xlane.xlu0 %314
      %v316 = vmul.f32 %v306, %v306
      %v317 = vmul.f32 %v307, %v307
      %v318 = vmul.f32 %v308, %v308
      %v319 = vmul.f32 %v309, %v309
      %v320 = vadd.f32 %v316, %v317
      %321 = vadd.xlane.f32.xlu0 %v320
      %v322 = vpop.xlane.xlu0 %321
      %v323 = vadd.f32 %v318, %v319
      %324 = vadd.xlane.f32.xlu0 %v323
      %v325 = vpop.xlane.xlu0 %324
      %vm326 = vcmask 7168
      %v327 = vsel %vm326, %v312, %v322
      %v328 = vsel %vm326, %v315, %v325
      %v329 = vld [vmem:[%s1] sm:$0xff]
      %v330 = vld [vmem:[%s1 + $0x8] sm:$0xff]
      %vm331 = vcmask 130048
      %v333 = vsel %vm331, %v329, 0
      %v336 = vsel %vm331, %v330, 0
      %338 = vmatprep.subr.mxu0 0.0
      %339 = vmatpush1.msra.mxu0 %v327
      %340 = vmatprep.subr.mxu0 0.0
      %341 = vmatpush1.msra.mxu0 %v328
      %342 = vmatprep.subr.mxu0 0.0
      %343 = vmatpush1.msra.mxu0 0.0
      %344 = vmatprep.subr.mxu0 0.0
      %345 = vmatpush1.msra.mxu0 0.0
      %346 = vmatprep.subr.mxu0 0.0
      %347 = vmatpush1.msra.mxu0 0.0
      %348 = vmatprep.subr.mxu0 0.0
      %349 = vmatpush1.msra.mxu0 0.0
      %350 = vmatprep.subr.mxu0 0.0
      %351 = vmatpush1.msra.mxu0 0.0
      %352 = vmatprep.subr.mxu0 0.0
      %353 = vmatpush1.msra.mxu0 0.0
      %354 = vmatprep.subr.mxu0 0.0
      %355 = vmatpush1.msra.mxu0 0.0
      %356 = vmatprep.subr.mxu0 0.0
      %357 = vmatpush1.msra.mxu0 0.0
      %358 = vmatprep.subr.mxu0 0.0
      %359 = vmatpush1.msra.mxu0 0.0
      %360 = vmatprep.subr.mxu0 0.0
      %361 = vmatpush1.msra.mxu0 0.0
      %362 = vmatprep.subr.mxu0 0.0
      %363 = vmatpush1.msra.mxu0 0.0
      %364 = vmatprep.subr.mxu0 0.0
      %365 = vmatpush1.msra.mxu0 0.0
      %366 = vmatprep.subr.mxu0 0.0
      %367 = vmatpush1.msra.mxu0 0.0
      %368 = vmatprep.subr.mxu0 0.0
      %369 = vmatpush1.msra.mxu0 0.0
      %370 = vmatprep.subr.mxu0 0.0
      %371 = vmatpush1.msra.mxu0 0.0
      %372 = vmatprep.subr.mxu0 0.0
      %373 = vmatpush1.msra.mxu0 0.0
      %374 = vmatprep.subr.mxu0 0.0
      %375 = vmatpush1.msra.mxu0 0.0
      %376 = vmatprep.subr.mxu0 0.0
      %377 = vmatpush1.msra.mxu0 0.0
      %378 = vmatprep.subr.mxu0 0.0
      %379 = vmatpush1.msra.mxu0 0.0
      %380 = vmatprep.subr.mxu0 0.0
      %381 = vmatpush1.msra.mxu0 0.0
      %382 = vmatprep.subr.mxu0 0.0
      %383 = vmatpush1.msra.mxu0 0.0
      %384 = vmatprep.subr.mxu0 0.0
      %385 = vmatpush1.msra.mxu0 0.0
      %386 = vmatprep.subr.mxu0 0.0
      %387 = vmatpush1.msra.mxu0 0.0
      %388 = vmatprep.subr.mxu0 0.0
      %389 = vmatpush1.msra.mxu0 0.0
      %390 = vmatprep.subr.mxu0 0.0
      %391 = vmatpush1.msra.mxu0 0.0
      %392 = vmatprep.subr.mxu0 0.0
      %393 = vmatpush1.msra.mxu0 0.0
      %394 = vmatprep.subr.mxu0 0.0
      %395 = vmatpush1.msra.mxu0 0.0
      %396 = vmatprep.subr.mxu0 0.0
      %397 = vmatpush1.msra.mxu0 0.0
      %398 = vmatprep.subr.mxu0 0.0
      %399 = vmatpush1.msra.mxu0 0.0
      %400 = vmatprep.subr.mxu0 0.0
      %401 = vmatpush1.msra.mxu0 0.0
      %402 = vmatprep.mubr.f32.mxu0 0.0
      %403 = vmatmul.mubr.f32.gmra.mrb[0].mxu0 %v333
      %v404 = vpop.f32.mrb[0].mxu0
      %v405 = vadd.f32 0.0, %v404
      %v406 = vpop.f32.mrb[0].mxu0
      %407 = vmatprep.mubr.f32.mxu0 0.0
      %408 = vmatmul.mubr.f32.gmra.mrb[0].mxu0 %v336
      %v409 = vpop.f32.mrb[0].mxu0
      %v410 = vadd.f32 0.0, %v409
      %v411 = vpop.f32.mrb[0].mxu0
      %412 = vdwg.mxu0
      %v413 = vrcp.pop 512.0
      %v414 = vmul.f32 %v405, %v413
      %v415 = vmul.f32 %v410, %v413
      %v416 = vmul.f32 %v414, %v414
      %v417 = vmul.f32 %v415, %v415
      %420 = vrot.lane.b32.xlu0 %v416, 1
      %v421 = vpop.permute.xlu0 %420
      %422 = vrot.lane.b32.xlu0 %v417, 1
      %v423 = vpop.permute.xlu0 %422
      %v426 = vsub.f32 %v414, %v421
      %v427 = vsub.f32 %v415, %v423
      %v428 = vmax.f32 %v426, 0.0
      %v429 = vmax.f32 %v427, 0.0
      %v430 = vadd.f32 %v428, 1e-06
      %v431 = vadd.f32 %v429, 1e-06
      %v432 = vrsqrt.pop %v430
      %v433 = vrsqrt.pop %v431
      %435 = vset.pattern.permute.xlu0 0
      %436 = vperm.xlu0 %435, %v414
      %v437 = vpop.permute.xlu0 %436
      %440 = vset.pattern.permute.xlu0 0
      %441 = vperm.xlu0 %440, %v415
      %v442 = vpop.permute.xlu0 %441
      %v444 = vsub.f32 %v306, %v437
      %v445 = vsub.f32 %v307, %v437
      %v446 = vsub.f32 %v308, %v442
      %v447 = vsub.f32 %v309, %v442
      %449 = vset.pattern.permute.xlu0 1
      %450 = vperm.xlu0 %449, %v432
      %v451 = vpop.permute.xlu0 %450
      %454 = vset.pattern.permute.xlu0 1
      %455 = vperm.xlu0 %454, %v433
      %v456 = vpop.permute.xlu0 %455
      %v458 = vmul.f32 %v444, %v451
      %v459 = vmul.f32 %v445, %v451
      %v460 = vmul.f32 %v446, %v456
      %v461 = vmul.f32 %v447, %v456
      %v462 = vld [vmem:[%s2] sm:$0xff]
      %v463 = vld [vmem:[%s2 + $0x8] sm:$0xff]
      %465 = vset.pattern.permute.xlu0 0
      %466 = vperm.xlu0 %465, %v462
      %v467 = vpop.permute.xlu0 %466
      %470 = vset.pattern.permute.xlu0 0
      %471 = vperm.xlu0 %470, %v463
      %v472 = vpop.permute.xlu0 %471
      %v474 = vmul.f32 %v458, %v467
      %v475 = vmul.f32 %v459, %v467
      %v476 = vmul.f32 %v460, %v472
      %v477 = vmul.f32 %v461, %v472
      %v478 = vld [vmem:[%s3] sm:$0xff]
      %v479 = vld [vmem:[%s3 + $0x8] sm:$0xff]
      %481 = vset.pattern.permute.xlu0 0
      %482 = vperm.xlu0 %481, %v478
      %v483 = vpop.permute.xlu0 %482
      %486 = vset.pattern.permute.xlu0 0
      %487 = vperm.xlu0 %486, %v479
      %v488 = vpop.permute.xlu0 %487
      %v490 = vadd.f32 %v474, %v483
      %v491 = vadd.f32 %v475, %v483
      %v492 = vadd.f32 %v476, %v488
      %v493 = vadd.f32 %v477, %v488
      %v494 = vld [vmem:[%s4] sm:$0xff]
      %v495 = vld [vmem:[%s4 + $0x8] sm:$0xff]
      %v496 = vld [vmem:[%s4 + $0x10] sm:$0xff]
      %v497 = vld [vmem:[%s4 + $0x18] sm:$0xff]
      %v498 = vld [vmem:[%s4 + $0x20] sm:$0xff]
      %v499 = vld [vmem:[%s4 + $0x28] sm:$0xff]
      %v500 = vld [vmem:[%s5] sm:$0xff]
      %v501 = vld [vmem:[%s5 + $0x8] sm:$0xff]
      %v502 = vld [vmem:[%s5 + $0x10] sm:$0xff]
      %v503 = vld [vmem:[%s5 + $0x18] sm:$0xff]
      %v504 = vld [vmem:[%s5 + $0x20] sm:$0xff]
      %v505 = vld [vmem:[%s5 + $0x28] sm:$0xff]
      %507 = vset.pattern.permute.xlu0 0
      %508 = vperm.xlu0 %507, %v500
      %v509 = vpop.permute.xlu0 %508
      %512 = vset.pattern.permute.xlu0 0
      %513 = vperm.xlu0 %512, %v501
      %v514 = vpop.permute.xlu0 %513
      %517 = vset.pattern.permute.xlu0 0
      %518 = vperm.xlu0 %517, %v502
      %v519 = vpop.permute.xlu0 %518
      %522 = vset.pattern.permute.xlu0 0
      %523 = vperm.xlu0 %522, %v503
      %v524 = vpop.permute.xlu0 %523
      %527 = vset.pattern.permute.xlu0 0
      %528 = vperm.xlu0 %527, %v504
      %v529 = vpop.permute.xlu0 %528
      %532 = vset.pattern.permute.xlu0 0
      %533 = vperm.xlu0 %532, %v505
      %v534 = vpop.permute.xlu0 %533
      %v537 = vsel %vm331, %v494, 0
      %v540 = vsel %vm331, %v495, 0
      %v543 = vsel %vm331, %v496, 0
      %v546 = vsel %vm331, %v497, 0
      %v549 = vsel %vm331, %v498, 0
      %v552 = vsel %vm331, %v499, 0
      %554 = vmatprep.subr.mxu0 %v491
      %555 = vmatpush1.msra.mxu0 %v490
      %556 = vmatprep.subr.mxu0 %v493
      %557 = vmatpush1.msra.mxu0 %v492
      %558 = vmatprep.subr.mxu0 0.0
      %559 = vmatpush1.msra.mxu0 0.0
      %560 = vmatprep.subr.mxu0 0.0
      %561 = vmatpush1.msra.mxu0 0.0
      %562 = vmatprep.subr.mxu0 0.0
      %563 = vmatpush1.msra.mxu0 0.0
      %564 = vmatprep.subr.mxu0 0.0
      %565 = vmatpush1.msra.mxu0 0.0
      %566 = vmatprep.subr.mxu0 0.0
      %567 = vmatpush1.msra.mxu0 0.0
      %568 = vmatprep.subr.mxu0 0.0
      %569 = vmatpush1.msra.mxu0 0.0
      %570 = vmatprep.subr.mxu0 0.0
      %571 = vmatpush1.msra.mxu0 0.0
      %572 = vmatprep.subr.mxu0 0.0
      %573 = vmatpush1.msra.mxu0 0.0
      %574 = vmatprep.subr.mxu0 0.0
      %575 = vmatpush1.msra.mxu0 0.0
      %576 = vmatprep.subr.mxu0 0.0
      %577 = vmatpush1.msra.mxu0 0.0
      %578 = vmatprep.subr.mxu0 0.0
      %579 = vmatpush1.msra.mxu0 0.0
      %580 = vmatprep.subr.mxu0 0.0
      %581 = vmatpush1.msra.mxu0 0.0
      %582 = vmatprep.subr.mxu0 0.0
      %583 = vmatpush1.msra.mxu0 0.0
      %584 = vmatprep.subr.mxu0 0.0
      %585 = vmatpush1.msra.mxu0 0.0
      %586 = vmatprep.subr.mxu0 0.0
      %587 = vmatpush1.msra.mxu0 0.0
      %588 = vmatprep.subr.mxu0 0.0
      %589 = vmatpush1.msra.mxu0 0.0
      %590 = vmatprep.subr.mxu0 0.0
      %591 = vmatpush1.msra.mxu0 0.0
      %592 = vmatprep.subr.mxu0 0.0
      %593 = vmatpush1.msra.mxu0 0.0
      %594 = vmatprep.subr.mxu0 0.0
      %595 = vmatpush1.msra.mxu0 0.0
      %596 = vmatprep.subr.mxu0 0.0
      %597 = vmatpush1.msra.mxu0 0.0
      %598 = vmatprep.subr.mxu0 0.0
      %599 = vmatpush1.msra.mxu0 0.0
      %600 = vmatprep.subr.mxu0 0.0
      %601 = vmatpush1.msra.mxu0 0.0
      %602 = vmatprep.subr.mxu0 0.0
      %603 = vmatpush1.msra.mxu0 0.0
      %604 = vmatprep.subr.mxu0 0.0
      %605 = vmatpush1.msra.mxu0 0.0
      %606 = vmatprep.subr.mxu0 0.0
      %607 = vmatpush1.msra.mxu0 0.0
      %608 = vmatprep.subr.mxu0 0.0
      %609 = vmatpush1.msra.mxu0 0.0
      %610 = vmatprep.subr.mxu0 0.0
      %611 = vmatpush1.msra.mxu0 0.0
      %612 = vmatprep.subr.mxu0 0.0
      %613 = vmatpush1.msra.mxu0 0.0
      %614 = vmatprep.subr.mxu0 0.0
      %615 = vmatpush1.msra.mxu0 0.0
      %616 = vmatprep.subr.mxu0 0.0
      %617 = vmatpush1.msra.mxu0 0.0
      %618 = vmatprep.mubr.f32.mxu0 0.0
      %619 = vmatmul.mubr.f32.gmra.mrb[0].mxu0 %v537
      %v620 = vpop.f32.mrb[0].mxu0
      %v621 = vadd.f32 %v509, %v620
      %v622 = vpop.f32.mrb[0].mxu0
      %v623 = vadd.f32 %v509, %v622
      %624 = vmatprep.mubr.f32.mxu0 0.0
      %625 = vmatmul.mubr.f32.gmra.mrb[0].mxu0 %v540
      %v626 = vpop.f32.mrb[0].mxu0
      %v627 = vadd.f32 %v514, %v626
      %v628 = vpop.f32.mrb[0].mxu0
      %v629 = vadd.f32 %v514, %v628
      %630 = vmatprep.mubr.f32.mxu0 0.0
      %631 = vmatmul.mubr.f32.gmra.mrb[0].mxu0 %v543
      %v632 = vpop.f32.mrb[0].mxu0
      %v633 = vadd.f32 %v519, %v632
      %v634 = vpop.f32.mrb[0].mxu0
      %v635 = vadd.f32 %v519, %v634
      %636 = vmatprep.mubr.f32.mxu0 0.0
      %637 = vmatmul.mubr.f32.gmra.mrb[0].mxu0 %v546
      %v638 = vpop.f32.mrb[0].mxu0
      %v639 = vadd.f32 %v524, %v638
      %v640 = vpop.f32.mrb[0].mxu0
      %v641 = vadd.f32 %v524, %v640
      %642 = vmatprep.mubr.f32.mxu0 0.0
      %643 = vmatmul.mubr.f32.gmra.mrb[0].mxu0 %v549
      %v644 = vpop.f32.mrb[0].mxu0
      %v645 = vadd.f32 %v529, %v644
      %v646 = vpop.f32.mrb[0].mxu0
      %v647 = vadd.f32 %v529, %v646
      %648 = vmatprep.mubr.f32.mxu0 0.0
      %649 = vmatmul.mubr.f32.gmra.mrb[0].mxu0 %v552
      %v650 = vpop.f32.mrb[0].mxu0
      %v651 = vadd.f32 %v534, %v650
      %v652 = vpop.f32.mrb[0].mxu0
      %v653 = vadd.f32 %v534, %v652
      %654 = vdwg.mxu0
      %655 = vxpose.xlu0.b32.start [1/16] %v621, 128
      %656 = vxpose.xlu0.b32.cont [2/16] %v627, 128
      %657 = vxpose.xlu0.b32.cont [3/16] 0.0, 128
      %658 = vxpose.xlu0.b32.cont [4/16] 0.0, 128
      %659 = vxpose.xlu0.b32.cont [5/16] 0.0, 128
      %660 = vxpose.xlu0.b32.cont [6/16] 0.0, 128
      %661 = vxpose.xlu0.b32.cont [7/16] 0.0, 128
      %662 = vxpose.xlu0.b32.cont [8/16] 0.0, 128
      %663 = vxpose.xlu0.b32.cont [9/16] 0.0, 128
      %664 = vxpose.xlu0.b32.cont [10/16] 0.0, 128
      %665 = vxpose.xlu0.b32.cont [11/16] 0.0, 128
      %666 = vxpose.xlu0.b32.cont [12/16] 0.0, 128
      %667 = vxpose.xlu0.b32.cont [13/16] 0.0, 128
      %668 = vxpose.xlu0.b32.cont [14/16] 0.0, 128
      %669 = vxpose.xlu0.b32.cont [15/16] 0.0, 128
      %670 = vxpose.xlu0.b32.end [16/16] 0.0, 128
      %v671 = vpop.trf.xlu0
      %v672 = vpop.trf.xlu0
      %v673 = vpop.trf.xlu0
      %v674 = vpop.trf.xlu0
      %v675 = vpop.trf.xlu0
      %v676 = vpop.trf.xlu0
      %v677 = vpop.trf.xlu0
      %v678 = vpop.trf.xlu0
      %v679 = vpop.trf.xlu0
      %v680 = vpop.trf.xlu0
      %v681 = vpop.trf.xlu0
      %v682 = vpop.trf.xlu0
      %v683 = vpop.trf.xlu0
      %v684 = vpop.trf.xlu0
      %v685 = vpop.trf.xlu0
      %v686 = vpop.trf.xlu0
      %687 = vxpose.xlu0.b32.start [1/16] %v623, 128
      %688 = vxpose.xlu0.b32.cont [2/16] %v629, 128
      %689 = vxpose.xlu0.b32.cont [3/16] 0.0, 128
      %690 = vxpose.xlu0.b32.cont [4/16] 0.0, 128
      %691 = vxpose.xlu0.b32.cont [5/16] 0.0, 128
      %692 = vxpose.xlu0.b32.cont [6/16] 0.0, 128
      %693 = vxpose.xlu0.b32.cont [7/16] 0.0, 128
      %694 = vxpose.xlu0.b32.cont [8/16] 0.0, 128
      %695 = vxpose.xlu0.b32.cont [9/16] 0.0, 128
      %696 = vxpose.xlu0.b32.cont [10/16] 0.0, 128
      %697 = vxpose.xlu0.b32.cont [11/16] 0.0, 128
      %698 = vxpose.xlu0.b32.cont [12/16] 0.0, 128
      %699 = vxpose.xlu0.b32.cont [13/16] 0.0, 128
      %700 = vxpose.xlu0.b32.cont [14/16] 0.0, 128
      %701 = vxpose.xlu0.b32.cont [15/16] 0.0, 128
      %702 = vxpose.xlu0.b32.end [16/16] 0.0, 128
      %v703 = vpop.trf.xlu0
      %v704 = vpop.trf.xlu0
      %v705 = vpop.trf.xlu0
      %v706 = vpop.trf.xlu0
      %v707 = vpop.trf.xlu0
      %v708 = vpop.trf.xlu0
      %v709 = vpop.trf.xlu0
      %v710 = vpop.trf.xlu0
      %v711 = vpop.trf.xlu0
      %v712 = vpop.trf.xlu0
      %v713 = vpop.trf.xlu0
      %v714 = vpop.trf.xlu0
      %v715 = vpop.trf.xlu0
      %v716 = vpop.trf.xlu0
      %v717 = vpop.trf.xlu0
      %v718 = vpop.trf.xlu0
      %v720 = vsel %vm331, %v671, 0
      %v723 = vsel %vm331, %v672, 0
      %v726 = vsel %vm331, %v673, 0
      %v729 = vsel %vm331, %v674, 0
      %v732 = vsel %vm331, %v675, 0
      %v735 = vsel %vm331, %v676, 0
      %v738 = vsel %vm331, %v677, 0
      %v741 = vsel %vm331, %v678, 0
      %v744 = vsel %vm331, %v679, 0
      %v747 = vsel %vm331, %v680, 0
      %v750 = vsel %vm331, %v681, 0
      %v753 = vsel %vm331, %v682, 0
      %v756 = vsel %vm331, %v683, 0
      %v759 = vsel %vm331, %v684, 0
      %v762 = vsel %vm331, %v685, 0
      %v765 = vsel %vm331, %v686, 0
      %v768 = vsel %vm331, %v703, 0
      %v771 = vsel %vm331, %v704, 0
      %v774 = vsel %vm331, %v705, 0
      %v777 = vsel %vm331, %v706, 0
      %v780 = vsel %vm331, %v707, 0
      %v783 = vsel %vm331, %v708, 0
      %v786 = vsel %vm331, %v709, 0
      %v789 = vsel %vm331, %v710, 0
      %v792 = vsel %vm331, %v711, 0
      %v795 = vsel %vm331, %v712, 0
      %v798 = vsel %vm331, %v713, 0
      %v801 = vsel %vm331, %v714, 0
      %v804 = vsel %vm331, %v715, 0
      %v807 = vsel %vm331, %v716, 0
      %v810 = vsel %vm331, %v717, 0
      %v813 = vsel %vm331, %v718, 0
      %815 = vmatprep.subr.mxu0 %v635
      %816 = vmatpush1.msra.mxu0 %v633
      %817 = vmatprep.subr.mxu0 %v641
      %818 = vmatpush1.msra.mxu0 %v639
      %819 = vmatprep.subr.mxu0 0.0
      %820 = vmatpush1.msra.mxu0 0.0
      %821 = vmatprep.subr.mxu0 0.0
      %822 = vmatpush1.msra.mxu0 0.0
      %823 = vmatprep.subr.mxu0 0.0
      %824 = vmatpush1.msra.mxu0 0.0
      %825 = vmatprep.subr.mxu0 0.0
      %826 = vmatpush1.msra.mxu0 0.0
      %827 = vmatprep.subr.mxu0 0.0
      %828 = vmatpush1.msra.mxu0 0.0
      %829 = vmatprep.subr.mxu0 0.0
      %830 = vmatpush1.msra.mxu0 0.0
      %831 = vmatprep.subr.mxu0 0.0
      %832 = vmatpush1.msra.mxu0 0.0
      %833 = vmatprep.subr.mxu0 0.0
      %834 = vmatpush1.msra.mxu0 0.0
      %835 = vmatprep.subr.mxu0 0.0
      %836 = vmatpush1.msra.mxu0 0.0
      %837 = vmatprep.subr.mxu0 0.0
      %838 = vmatpush1.msra.mxu0 0.0
      %839 = vmatprep.subr.mxu0 0.0
      %840 = vmatpush1.msra.mxu0 0.0
      %841 = vmatprep.subr.mxu0 0.0
      %842 = vmatpush1.msra.mxu0 0.0
      %843 = vmatprep.subr.mxu0 0.0
      %844 = vmatpush1.msra.mxu0 0.0
      %845 = vmatprep.subr.mxu0 0.0
      %846 = vmatpush1.msra.mxu0 0.0
      %847 = vmatprep.subr.mxu0 0.0
      %848 = vmatpush1.msra.mxu0 0.0
      %849 = vmatprep.subr.mxu0 0.0
      %850 = vmatpush1.msra.mxu0 0.0
      %851 = vmatprep.subr.mxu0 0.0
      %852 = vmatpush1.msra.mxu0 0.0
      %853 = vmatprep.subr.mxu0 0.0
      %854 = vmatpush1.msra.mxu0 0.0
      %855 = vmatprep.subr.mxu0 0.0
      %856 = vmatpush1.msra.mxu0 0.0
      %857 = vmatprep.subr.mxu0 0.0
      %858 = vmatpush1.msra.mxu0 0.0
      %859 = vmatprep.subr.mxu0 0.0
      %860 = vmatpush1.msra.mxu0 0.0
      %861 = vmatprep.subr.mxu0 0.0
      %862 = vmatpush1.msra.mxu0 0.0
      %863 = vmatprep.subr.mxu0 0.0
      %864 = vmatpush1.msra.mxu0 0.0
      %865 = vmatprep.subr.mxu0 0.0
      %866 = vmatpush1.msra.mxu0 0.0
      %867 = vmatprep.subr.mxu0 0.0
      %868 = vmatpush1.msra.mxu0 0.0
      %869 = vmatprep.subr.mxu0 0.0
      %870 = vmatpush1.msra.mxu0 0.0
      %871 = vmatprep.subr.mxu0 0.0
      %872 = vmatpush1.msra.mxu0 0.0
      %873 = vmatprep.subr.mxu0 0.0
      %874 = vmatpush1.msra.mxu0 0.0
      %875 = vmatprep.subr.mxu0 0.0
      %876 = vmatpush1.msra.mxu0 0.0
      %877 = vmatprep.subr.mxu0 0.0
      %878 = vmatpush1.msra.mxu0 0.0
      %879 = vmatprep.mubr.f32.mxu0 0.0
      %880 = vmatmul.mubr.f32.gmra.mrb[0].mxu0 %v720
      %v881 = vpop.f32.mrb[0].mxu0
      %v882 = vadd.f32 0.0, %v881
      %v883 = vpop.f32.mrb[0].mxu0
      %v884 = vadd.f32 0.0, %v883
      %885 = vmatprep.mubr.f32.mxu0 0.0
      %886 = vmatmul.mubr.f32.gmra.mrb[0].mxu0 %v723
      %v887 = vpop.f32.mrb[0].mxu0
      %v888 = vadd.f32 0.0, %v887
      %v889 = vpop.f32.mrb[0].mxu0
      %v890 = vadd.f32 0.0, %v889
      %891 = vmatprep.mubr.f32.mxu0 0.0
      %892 = vmatmul.mubr.f32.gmra.mrb[0].mxu0 %v726
      %v893 = vpop.f32.mrb[0].mxu0
      %v894 = vadd.f32 0.0, %v893
      %v895 = vpop.f32.mrb[0].mxu0
      %v896 = vadd.f32 0.0, %v895
      %897 = vmatprep.mubr.f32.mxu0 0.0
      %898 = vmatmul.mubr.f32.gmra.mrb[0].mxu0 %v729
      %v899 = vpop.f32.mrb[0].mxu0
      %v900 = vadd.f32 0.0, %v899
      %v901 = vpop.f32.mrb[0].mxu0
      %v902 = vadd.f32 0.0, %v901
      %903 = vmatprep.mubr.f32.mxu0 0.0
      %904 = vmatmul.mubr.f32.gmra.mrb[0].mxu0 %v732
      %v905 = vpop.f32.mrb[0].mxu0
      %v906 = vadd.f32 0.0, %v905
      %v907 = vpop.f32.mrb[0].mxu0
      %v908 = vadd.f32 0.0, %v907
      %909 = vmatprep.mubr.f32.mxu0 0.0
      %910 = vmatmul.mubr.f32.gmra.mrb[0].mxu0 %v735
      %v911 = vpop.f32.mrb[0].mxu0
      %v912 = vadd.f32 0.0, %v911
      %v913 = vpop.f32.mrb[0].mxu0
      %v914 = vadd.f32 0.0, %v913
      %915 = vmatprep.mubr.f32.mxu0 0.0
      %916 = vmatmul.mubr.f32.gmra.mrb[0].mxu0 %v738
      %v917 = vpop.f32.mrb[0].mxu0
      %v918 = vadd.f32 0.0, %v917
      %v919 = vpop.f32.mrb[0].mxu0
      %v920 = vadd.f32 0.0, %v919
      %921 = vmatprep.mubr.f32.mxu0 0.0
      %922 = vmatmul.mubr.f32.gmra.mrb[0].mxu0 %v741
      %v923 = vpop.f32.mrb[0].mxu0
      %v924 = vadd.f32 0.0, %v923
      %v925 = vpop.f32.mrb[0].mxu0
      %v926 = vadd.f32 0.0, %v925
      %927 = vmatprep.mubr.f32.mxu0 0.0
      %928 = vmatmul.mubr.f32.gmra.mrb[0].mxu0 %v744
      %v929 = vpop.f32.mrb[0].mxu0
      %v930 = vadd.f32 0.0, %v929
      %v931 = vpop.f32.mrb[0].mxu0
      %v932 = vadd.f32 0.0, %v931
      %933 = vmatprep.mubr.f32.mxu0 0.0
      %934 = vmatmul.mubr.f32.gmra.mrb[0].mxu0 %v747
      %v935 = vpop.f32.mrb[0].mxu0
      %v936 = vadd.f32 0.0, %v935
      %v937 = vpop.f32.mrb[0].mxu0
      %v938 = vadd.f32 0.0, %v937
      %939 = vmatprep.mubr.f32.mxu0 0.0
      %940 = vmatmul.mubr.f32.gmra.mrb[0].mxu0 %v750
      %v941 = vpop.f32.mrb[0].mxu0
      %v942 = vadd.f32 0.0, %v941
      %v943 = vpop.f32.mrb[0].mxu0
      %v944 = vadd.f32 0.0, %v943
      %945 = vmatprep.mubr.f32.mxu0 0.0
      %946 = vmatmul.mubr.f32.gmra.mrb[0].mxu0 %v753
      %v947 = vpop.f32.mrb[0].mxu0
      %v948 = vadd.f32 0.0, %v947
      %v949 = vpop.f32.mrb[0].mxu0
      %v950 = vadd.f32 0.0, %v949
      %951 = vmatprep.mubr.f32.mxu0 0.0
      %952 = vmatmul.mubr.f32.gmra.mrb[0].mxu0 %v756
      %v953 = vpop.f32.mrb[0].mxu0
      %v954 = vadd.f32 0.0, %v953
      %v955 = vpop.f32.mrb[0].mxu0
      %v956 = vadd.f32 0.0, %v955
      %957 = vmatprep.mubr.f32.mxu0 0.0
      %958 = vmatmul.mubr.f32.gmra.mrb[0].mxu0 %v759
      %v959 = vpop.f32.mrb[0].mxu0
      %v960 = vadd.f32 0.0, %v959
      %v961 = vpop.f32.mrb[0].mxu0
      %v962 = vadd.f32 0.0, %v961
      %963 = vmatprep.mubr.f32.mxu0 0.0
      %964 = vmatmul.mubr.f32.gmra.mrb[0].mxu0 %v762
      %v965 = vpop.f32.mrb[0].mxu0
      %v966 = vadd.f32 0.0, %v965
      %v967 = vpop.f32.mrb[0].mxu0
      %v968 = vadd.f32 0.0, %v967
      %969 = vmatprep.mubr.f32.mxu0 0.0
      %970 = vmatmul.mubr.f32.gmra.mrb[0].mxu0 %v765
      %v971 = vpop.f32.mrb[0].mxu0
      %v972 = vadd.f32 0.0, %v971
      %v973 = vpop.f32.mrb[0].mxu0
      %v974 = vadd.f32 0.0, %v973
      %975 = vmatprep.mubr.f32.mxu0 0.0
      %976 = vmatmul.mubr.f32.gmra.mrb[0].mxu0 %v768
      %v977 = vpop.f32.mrb[0].mxu0
      %v978 = vadd.f32 0.0, %v977
      %v979 = vpop.f32.mrb[0].mxu0
      %v980 = vadd.f32 0.0, %v979
      %981 = vmatprep.mubr.f32.mxu0 0.0
      %982 = vmatmul.mubr.f32.gmra.mrb[0].mxu0 %v771
      %v983 = vpop.f32.mrb[0].mxu0
      %v984 = vadd.f32 0.0, %v983
      %v985 = vpop.f32.mrb[0].mxu0
      %v986 = vadd.f32 0.0, %v985
      %987 = vmatprep.mubr.f32.mxu0 0.0
      %988 = vmatmul.mubr.f32.gmra.mrb[0].mxu0 %v774
      %v989 = vpop.f32.mrb[0].mxu0
      %v990 = vadd.f32 0.0, %v989
      %v991 = vpop.f32.mrb[0].mxu0
      %v992 = vadd.f32 0.0, %v991
      %993 = vmatprep.mubr.f32.mxu0 0.0
      %994 = vmatmul.mubr.f32.gmra.mrb[0].mxu0 %v777
      %v995 = vpop.f32.mrb[0].mxu0
      %v996 = vadd.f32 0.0, %v995
      %v997 = vpop.f32.mrb[0].mxu0
      %v998 = vadd.f32 0.0, %v997
      %999 = vmatprep.mubr.f32.mxu0 0.0
      %1000 = vmatmul.mubr.f32.gmra.mrb[0].mxu0 %v780
      %v1001 = vpop.f32.mrb[0].mxu0
      %v1002 = vadd.f32 0.0, %v1001
      %v1003 = vpop.f32.mrb[0].mxu0
      %v1004 = vadd.f32 0.0, %v1003
      %1005 = vmatprep.mubr.f32.mxu0 0.0
      %1006 = vmatmul.mubr.f32.gmra.mrb[0].mxu0 %v783
      %v1007 = vpop.f32.mrb[0].mxu0
      %v1008 = vadd.f32 0.0, %v1007
      %v1009 = vpop.f32.mrb[0].mxu0
      %v1010 = vadd.f32 0.0, %v1009
      %1011 = vmatprep.mubr.f32.mxu0 0.0
      %1012 = vmatmul.mubr.f32.gmra.mrb[0].mxu0 %v786
      %v1013 = vpop.f32.mrb[0].mxu0
      %v1014 = vadd.f32 0.0, %v1013
      %v1015 = vpop.f32.mrb[0].mxu0
      %v1016 = vadd.f32 0.0, %v1015
      %1017 = vmatprep.mubr.f32.mxu0 0.0
      %1018 = vmatmul.mubr.f32.gmra.mrb[0].mxu0 %v789
      %v1019 = vpop.f32.mrb[0].mxu0
      %v1020 = vadd.f32 0.0, %v1019
      %v1021 = vpop.f32.mrb[0].mxu0
      %v1022 = vadd.f32 0.0, %v1021
      %1023 = vmatprep.mubr.f32.mxu0 0.0
      %1024 = vmatmul.mubr.f32.gmra.mrb[0].mxu0 %v792
      %v1025 = vpop.f32.mrb[0].mxu0
      %v1026 = vadd.f32 0.0, %v1025
      %v1027 = vpop.f32.mrb[0].mxu0
      %v1028 = vadd.f32 0.0, %v1027
      %1029 = vmatprep.mubr.f32.mxu0 0.0
      %1030 = vmatmul.mubr.f32.gmra.mrb[0].mxu0 %v795
      %v1031 = vpop.f32.mrb[0].mxu0
      %v1032 = vadd.f32 0.0, %v1031
      %v1033 = vpop.f32.mrb[0].mxu0
      %v1034 = vadd.f32 0.0, %v1033
      %1035 = vmatprep.mubr.f32.mxu0 0.0
      %1036 = vmatmul.mubr.f32.gmra.mrb[0].mxu0 %v798
      %v1037 = vpop.f32.mrb[0].mxu0
      %v1038 = vadd.f32 0.0, %v1037
      %v1039 = vpop.f32.mrb[0].mxu0
      %v1040 = vadd.f32 0.0, %v1039
      %1041 = vmatprep.mubr.f32.mxu0 0.0
      %1042 = vmatmul.mubr.f32.gmra.mrb[0].mxu0 %v801
      %v1043 = vpop.f32.mrb[0].mxu0
      %v1044 = vadd.f32 0.0, %v1043
      %v1045 = vpop.f32.mrb[0].mxu0
      %v1046 = vadd.f32 0.0, %v1045
      %1047 = vmatprep.mubr.f32.mxu0 0.0
      %1048 = vmatmul.mubr.f32.gmra.mrb[0].mxu0 %v804
      %v1049 = vpop.f32.mrb[0].mxu0
      %v1050 = vadd.f32 0.0, %v1049
      %v1051 = vpop.f32.mrb[0].mxu0
      %v1052 = vadd.f32 0.0, %v1051
      %1053 = vmatprep.mubr.f32.mxu0 0.0
      %1054 = vmatmul.mubr.f32.gmra.mrb[0].mxu0 %v807
      %v1055 = vpop.f32.mrb[0].mxu0
      %v1056 = vadd.f32 0.0, %v1055
      %v1057 = vpop.f32.mrb[0].mxu0
      %v1058 = vadd.f32 0.0, %v1057
      %1059 = vmatprep.mubr.f32.mxu0 0.0
      %1060 = vmatmul.mubr.f32.gmra.mrb[0].mxu0 %v810
      %v1061 = vpop.f32.mrb[0].mxu0
      %v1062 = vadd.f32 0.0, %v1061
      %v1063 = vpop.f32.mrb[0].mxu0
      %v1064 = vadd.f32 0.0, %v1063
      %1065 = vmatprep.mubr.f32.mxu0 0.0
      %1066 = vmatmul.mubr.f32.gmra.mrb[0].mxu0 %v813
      %v1067 = vpop.f32.mrb[0].mxu0
      %v1068 = vadd.f32 0.0, %v1067
      %v1069 = vpop.f32.mrb[0].mxu0
      %v1070 = vadd.f32 0.0, %v1069
      %1071 = vdwg.mxu0
      %v1072 = vmax.f32 %v882, %v884
      %1073 = vmax.xlane.f32.xlu0 %v1072
      %v1074 = vpop.xlane.xlu0 %1073
      %v1075 = vmax.f32 %v888, %v890
      %1076 = vmax.xlane.f32.xlu0 %v1075
      %v1077 = vpop.xlane.xlu0 %1076
      %v1078 = vmax.f32 %v894, %v896
      %1079 = vmax.xlane.f32.xlu0 %v1078
      %v1080 = vpop.xlane.xlu0 %1079
      %v1081 = vmax.f32 %v900, %v902
      %1082 = vmax.xlane.f32.xlu0 %v1081
      %v1083 = vpop.xlane.xlu0 %1082
      %v1084 = vmax.f32 %v906, %v908
      %1085 = vmax.xlane.f32.xlu0 %v1084
      %v1086 = vpop.xlane.xlu0 %1085
      %v1087 = vmax.f32 %v912, %v914
      %1088 = vmax.xlane.f32.xlu0 %v1087
      %v1089 = vpop.xlane.xlu0 %1088
      %v1090 = vmax.f32 %v918, %v920
      %1091 = vmax.xlane.f32.xlu0 %v1090
      %v1092 = vpop.xlane.xlu0 %1091
      %v1093 = vmax.f32 %v924, %v926
      %1094 = vmax.xlane.f32.xlu0 %v1093
      %v1095 = vpop.xlane.xlu0 %1094
      %v1096 = vmax.f32 %v930, %v932
      %1097 = vmax.xlane.f32.xlu0 %v1096
      %v1098 = vpop.xlane.xlu0 %1097
      %v1099 = vmax.f32 %v936, %v938
      %1100 = vmax.xlane.f32.xlu0 %v1099
      %v1101 = vpop.xlane.xlu0 %1100
      %v1102 = vmax.f32 %v942, %v944
      %1103 = vmax.xlane.f32.xlu0 %v1102
      %v1104 = vpop.xlane.xlu0 %1103
      %v1105 = vmax.f32 %v948, %v950
      %1106 = vmax.xlane.f32.xlu0 %v1105
      %v1107 = vpop.xlane.xlu0 %1106
      %v1108 = vmax.f32 %v954, %v956
      %1109 = vmax.xlane.f32.xlu0 %v1108
      %v1110 = vpop.xlane.xlu0 %1109
      %v1111 = vmax.f32 %v960, %v962
      %1112 = vmax.xlane.f32.xlu0 %v1111
      %v1113 = vpop.xlane.xlu0 %1112
      %v1114 = vmax.f32 %v966, %v968
      %1115 = vmax.xlane.f32.xlu0 %v1114
      %v1116 = vpop.xlane.xlu0 %1115
      %v1117 = vmax.f32 %v972, %v974
      %1118 = vmax.xlane.f32.xlu0 %v1117
      %v1119 = vpop.xlane.xlu0 %1118
      %v1120 = vmax.f32 %v978, %v980
      %1121 = vmax.xlane.f32.xlu0 %v1120
      %v1122 = vpop.xlane.xlu0 %1121
      %v1123 = vmax.f32 %v984, %v986
      %1124 = vmax.xlane.f32.xlu0 %v1123
      %v1125 = vpop.xlane.xlu0 %1124
      %v1126 = vmax.f32 %v990, %v992
      %1127 = vmax.xlane.f32.xlu0 %v1126
      %v1128 = vpop.xlane.xlu0 %1127
      %v1129 = vmax.f32 %v996, %v998
      %1130 = vmax.xlane.f32.xlu0 %v1129
      %v1131 = vpop.xlane.xlu0 %1130
      %v1132 = vmax.f32 %v1002, %v1004
      %1133 = vmax.xlane.f32.xlu0 %v1132
      %v1134 = vpop.xlane.xlu0 %1133
      %v1135 = vmax.f32 %v1008, %v1010
      %1136 = vmax.xlane.f32.xlu0 %v1135
      %v1137 = vpop.xlane.xlu0 %1136
      %v1138 = vmax.f32 %v1014, %v1016
      %1139 = vmax.xlane.f32.xlu0 %v1138
      %v1140 = vpop.xlane.xlu0 %1139
      %v1141 = vmax.f32 %v1020, %v1022
      %1142 = vmax.xlane.f32.xlu0 %v1141
      %v1143 = vpop.xlane.xlu0 %1142
      %v1144 = vmax.f32 %v1026, %v1028
      %1145 = vmax.xlane.f32.xlu0 %v1144
      %v1146 = vpop.xlane.xlu0 %1145
      %v1147 = vmax.f32 %v1032, %v1034
      %1148 = vmax.xlane.f32.xlu0 %v1147
      %v1149 = vpop.xlane.xlu0 %1148
      %v1150 = vmax.f32 %v1038, %v1040
      %1151 = vmax.xlane.f32.xlu0 %v1150
      %v1152 = vpop.xlane.xlu0 %1151
      %v1153 = vmax.f32 %v1044, %v1046
      %1154 = vmax.xlane.f32.xlu0 %v1153
      %v1155 = vpop.xlane.xlu0 %1154
      %v1156 = vmax.f32 %v1050, %v1052
      %1157 = vmax.xlane.f32.xlu0 %v1156
      %v1158 = vpop.xlane.xlu0 %1157
      %v1159 = vmax.f32 %v1056, %v1058
      %1160 = vmax.xlane.f32.xlu0 %v1159
      %v1161 = vpop.xlane.xlu0 %1160
      %v1162 = vmax.f32 %v1062, %v1064
      %1163 = vmax.xlane.f32.xlu0 %v1162
      %v1164 = vpop.xlane.xlu0 %1163
      %v1165 = vmax.f32 %v1068, %v1070
      %1166 = vmax.xlane.f32.xlu0 %v1165
      %v1167 = vpop.xlane.xlu0 %1166
      %v1168 = vsub.f32 %v882, %v1074
      %v1169 = vsub.f32 %v884, %v1074
      %v1170 = vsub.f32 %v888, %v1077
      %v1171 = vsub.f32 %v890, %v1077
      %v1172 = vsub.f32 %v894, %v1080
      %v1173 = vsub.f32 %v896, %v1080
      %v1174 = vsub.f32 %v900, %v1083
      %v1175 = vsub.f32 %v902, %v1083
      %v1176 = vsub.f32 %v906, %v1086
      %v1177 = vsub.f32 %v908, %v1086
      %v1178 = vsub.f32 %v912, %v1089
      %v1179 = vsub.f32 %v914, %v1089
      %v1180 = vsub.f32 %v918, %v1092
      %v1181 = vsub.f32 %v920, %v1092
      %v1182 = vsub.f32 %v924, %v1095
      %v1183 = vsub.f32 %v926, %v1095
      %v1184 = vsub.f32 %v930, %v1098
      %v1185 = vsub.f32 %v932, %v1098
      %v1186 = vsub.f32 %v936, %v1101
      %v1187 = vsub.f32 %v938, %v1101
      %v1188 = vsub.f32 %v942, %v1104
      %v1189 = vsub.f32 %v944, %v1104
      %v1190 = vsub.f32 %v948, %v1107
      %v1191 = vsub.f32 %v950, %v1107
      %v1192 = vsub.f32 %v954, %v1110
      %v1193 = vsub.f32 %v956, %v1110
      %v1194 = vsub.f32 %v960, %v1113
      %v1195 = vsub.f32 %v962, %v1113
      %v1196 = vsub.f32 %v966, %v1116
      %v1197 = vsub.f32 %v968, %v1116
      %v1198 = vsub.f32 %v972, %v1119
      %v1199 = vsub.f32 %v974, %v1119
      %v1200 = vsub.f32 %v978, %v1122
      %v1201 = vsub.f32 %v980, %v1122
      %v1202 = vsub.f32 %v984, %v1125
      %v1203 = vsub.f32 %v986, %v1125
      %v1204 = vsub.f32 %v990, %v1128
      %v1205 = vsub.f32 %v992, %v1128
      %v1206 = vsub.f32 %v996, %v1131
      %v1207 = vsub.f32 %v998, %v1131
      %v1208 = vsub.f32 %v1002, %v1134
      %v1209 = vsub.f32 %v1004, %v1134
      %v1210 = vsub.f32 %v1008, %v1137
      %v1211 = vsub.f32 %v1010, %v1137
      %v1212 = vsub.f32 %v1014, %v1140
      %v1213 = vsub.f32 %v1016, %v1140
      %v1214 = vsub.f32 %v1020, %v1143
      %v1215 = vsub.f32 %v1022, %v1143
      %v1216 = vsub.f32 %v1026, %v1146
      %v1217 = vsub.f32 %v1028, %v1146
      %v1218 = vsub.f32 %v1032, %v1149
      %v1219 = vsub.f32 %v1034, %v1149
      %v1220 = vsub.f32 %v1038, %v1152
      %v1221 = vsub.f32 %v1040, %v1152
      %v1222 = vsub.f32 %v1044, %v1155
      %v1223 = vsub.f32 %v1046, %v1155
      %v1224 = vsub.f32 %v1050, %v1158
      %v1225 = vsub.f32 %v1052, %v1158
      %v1226 = vsub.f32 %v1056, %v1161
      %v1227 = vsub.f32 %v1058, %v1161
      %v1228 = vsub.f32 %v1062, %v1164
      %v1229 = vsub.f32 %v1064, %v1164
      %v1230 = vsub.f32 %v1068, %v1167
      %v1231 = vsub.f32 %v1070, %v1167
      %v1232 = vmul.f32 %v1168, 1.442695
      %v1233 = vpow.pop %v1232
      %v1234 = vmul.f32 %v1169, 1.442695
      %v1235 = vpow.pop %v1234
      %v1236 = vmul.f32 %v1170, 1.442695
      %v1237 = vpow.pop %v1236
      %v1238 = vmul.f32 %v1171, 1.442695
      %v1239 = vpow.pop %v1238
      %v1240 = vmul.f32 %v1172, 1.442695
      %v1241 = vpow.pop %v1240
      %v1242 = vmul.f32 %v1173, 1.442695
      %v1243 = vpow.pop %v1242
      %v1244 = vmul.f32 %v1174, 1.442695
      %v1245 = vpow.pop %v1244
      %v1246 = vmul.f32 %v1175, 1.442695
      %v1247 = vpow.pop %v1246
      %v1248 = vmul.f32 %v1176, 1.442695
      %v1249 = vpow.pop %v1248
      %v1250 = vmul.f32 %v1177, 1.442695
      %v1251 = vpow.pop %v1250
      %v1252 = vmul.f32 %v1178, 1.442695
      %v1253 = vpow.pop %v1252
      %v1254 = vmul.f32 %v1179, 1.442695
      %v1255 = vpow.pop %v1254
      %v1256 = vmul.f32 %v1180, 1.442695
      %v1257 = vpow.pop %v1256
      %v1258 = vmul.f32 %v1181, 1.442695
      %v1259 = vpow.pop %v1258
      %v1260 = vmul.f32 %v1182, 1.442695
      %v1261 = vpow.pop %v1260
      %v1262 = vmul.f32 %v1183, 1.442695
      %v1263 = vpow.pop %v1262
      %v1264 = vmul.f32 %v1184, 1.442695
      %v1265 = vpow.pop %v1264
      %v1266 = vmul.f32 %v1185, 1.442695
      %v1267 = vpow.pop %v1266
      %v1268 = vmul.f32 %v1186, 1.442695
      %v1269 = vpow.pop %v1268
      %v1270 = vmul.f32 %v1187, 1.442695
      %v1271 = vpow.pop %v1270
      %v1272 = vmul.f32 %v1188, 1.442695
      %v1273 = vpow.pop %v1272
      %v1274 = vmul.f32 %v1189, 1.442695
      %v1275 = vpow.pop %v1274
      %v1276 = vmul.f32 %v1190, 1.442695
      %v1277 = vpow.pop %v1276
      %v1278 = vmul.f32 %v1191, 1.442695
      %v1279 = vpow.pop %v1278
      %v1280 = vmul.f32 %v1192, 1.442695
      %v1281 = vpow.pop %v1280
      %v1282 = vmul.f32 %v1193, 1.442695
      %v1283 = vpow.pop %v1282
      %v1284 = vmul.f32 %v1194, 1.442695
      %v1285 = vpow.pop %v1284
      %v1286 = vmul.f32 %v1195, 1.442695
      %v1287 = vpow.pop %v1286
      %v1288 = vmul.f32 %v1196, 1.442695
      %v1289 = vpow.pop %v1288
      %v1290 = vmul.f32 %v1197, 1.442695
      %v1291 = vpow.pop %v1290
      %v1292 = vmul.f32 %v1198, 1.442695
      %v1293 = vpow.pop %v1292
      %v1294 = vmul.f32 %v1199, 1.442695
      %v1295 = vpow.pop %v1294
      %v1296 = vmul.f32 %v1200, 1.442695
      %v1297 = vpow.pop %v1296
      %v1298 = vmul.f32 %v1201, 1.442695
      %v1299 = vpow.pop %v1298
      %v1300 = vmul.f32 %v1202, 1.442695
      %v1301 = vpow.pop %v1300
      %v1302 = vmul.f32 %v1203, 1.442695
      %v1303 = vpow.pop %v1302
      %v1304 = vmul.f32 %v1204, 1.442695
      %v1305 = vpow.pop %v1304
      %v1306 = vmul.f32 %v1205, 1.442695
      %v1307 = vpow.pop %v1306
      %v1308 = vmul.f32 %v1206, 1.442695
      %v1309 = vpow.pop %v1308
      %v1310 = vmul.f32 %v1207, 1.442695
      %v1311 = vpow.pop %v1310
      %v1312 = vmul.f32 %v1208, 1.442695
      %v1313 = vpow.pop %v1312
      %v1314 = vmul.f32 %v1209, 1.442695
      %v1315 = vpow.pop %v1314
      %v1316 = vmul.f32 %v1210, 1.442695
      %v1317 = vpow.pop %v1316
      %v1318 = vmul.f32 %v1211, 1.442695
      %v1319 = vpow.pop %v1318
      %v1320 = vmul.f32 %v1212, 1.442695
      %v1321 = vpow.pop %v1320
      %v1322 = vmul.f32 %v1213, 1.442695
      %v1323 = vpow.pop %v1322
      %v1324 = vmul.f32 %v1214, 1.442695
      %v1325 = vpow.pop %v1324
      %v1326 = vmul.f32 %v1215, 1.442695
      %v1327 = vpow.pop %v1326
      %v1328 = vmul.f32 %v1216, 1.442695
      %v1329 = vpow.pop %v1328
      %v1330 = vmul.f32 %v1217, 1.442695
      %v1331 = vpow.pop %v1330
      %v1332 = vmul.f32 %v1218, 1.442695
      %v1333 = vpow.pop %v1332
      %v1334 = vmul.f32 %v1219, 1.442695
      %v1335 = vpow.pop %v1334
      %v1336 = vmul.f32 %v1220, 1.442695
      %v1337 = vpow.pop %v1336
      %v1338 = vmul.f32 %v1221, 1.442695
      %v1339 = vpow.pop %v1338
      %v1340 = vmul.f32 %v1222, 1.442695
      %v1341 = vpow.pop %v1340
      %v1342 = vmul.f32 %v1223, 1.442695
      %v1343 = vpow.pop %v1342
      %v1344 = vmul.f32 %v1224, 1.442695
      %v1345 = vpow.pop %v1344
      %v1346 = vmul.f32 %v1225, 1.442695
      %v1347 = vpow.pop %v1346
      %v1348 = vmul.f32 %v1226, 1.442695
      %v1349 = vpow.pop %v1348
      %v1350 = vmul.f32 %v1227, 1.442695
      %v1351 = vpow.pop %v1350
      %v1352 = vmul.f32 %v1228, 1.442695
      %v1353 = vpow.pop %v1352
      %v1354 = vmul.f32 %v1229, 1.442695
      %v1355 = vpow.pop %v1354
      %v1356 = vmul.f32 %v1230, 1.442695
      %v1357 = vpow.pop %v1356
      %v1358 = vmul.f32 %v1231, 1.442695
      %v1359 = vpow.pop %v1358
      %v1360 = vadd.f32 %v1233, %v1235
      %1361 = vadd.xlane.f32.xlu0 %v1360
      %v1362 = vpop.xlane.xlu0 %1361
      %v1363 = vadd.f32 %v1237, %v1239
      %1364 = vadd.xlane.f32.xlu0 %v1363
      %v1365 = vpop.xlane.xlu0 %1364
      %v1366 = vadd.f32 %v1241, %v1243
      %1367 = vadd.xlane.f32.xlu0 %v1366
      %v1368 = vpop.xlane.xlu0 %1367
      %v1369 = vadd.f32 %v1245, %v1247
      %1370 = vadd.xlane.f32.xlu0 %v1369
      %v1371 = vpop.xlane.xlu0 %1370
      %v1372 = vadd.f32 %v1249, %v1251
      %1373 = vadd.xlane.f32.xlu0 %v1372
      %v1374 = vpop.xlane.xlu0 %1373
      %v1375 = vadd.f32 %v1253, %v1255
      %1376 = vadd.xlane.f32.xlu0 %v1375
      %v1377 = vpop.xlane.xlu0 %1376
      %v1378 = vadd.f32 %v1257, %v1259
      %1379 = vadd.xlane.f32.xlu0 %v1378
      %v1380 = vpop.xlane.xlu0 %1379
      %v1381 = vadd.f32 %v1261, %v1263
      %1382 = vadd.xlane.f32.xlu0 %v1381
      %v1383 = vpop.xlane.xlu0 %1382
      %v1384 = vadd.f32 %v1265, %v1267
      %1385 = vadd.xlane.f32.xlu0 %v1384
      %v1386 = vpop.xlane.xlu0 %1385
      %v1387 = vadd.f32 %v1269, %v1271
      %1388 = vadd.xlane.f32.xlu0 %v1387
      %v1389 = vpop.xlane.xlu0 %1388
      %v1390 = vadd.f32 %v1273, %v1275
      %1391 = vadd.xlane.f32.xlu0 %v1390
      %v1392 = vpop.xlane.xlu0 %1391
      %v1393 = vadd.f32 %v1277, %v1279
      %1394 = vadd.xlane.f32.xlu0 %v1393
      %v1395 = vpop.xlane.xlu0 %1394
      %v1396 = vadd.f32 %v1281, %v1283
      %1397 = vadd.xlane.f32.xlu0 %v1396
      %v1398 = vpop.xlane.xlu0 %1397
      %v1399 = vadd.f32 %v1285, %v1287
      %1400 = vadd.xlane.f32.xlu0 %v1399
      %v1401 = vpop.xlane.xlu0 %1400
      %v1402 = vadd.f32 %v1289, %v1291
      %1403 = vadd.xlane.f32.xlu0 %v1402
      %v1404 = vpop.xlane.xlu0 %1403
      %v1405 = vadd.f32 %v1293, %v1295
      %1406 = vadd.xlane.f32.xlu0 %v1405
      %v1407 = vpop.xlane.xlu0 %1406
      %v1408 = vadd.f32 %v1297, %v1299
      %1409 = vadd.xlane.f32.xlu0 %v1408
      %v1410 = vpop.xlane.xlu0 %1409
      %v1411 = vadd.f32 %v1301, %v1303
      %1412 = vadd.xlane.f32.xlu0 %v1411
      %v1413 = vpop.xlane.xlu0 %1412
      %v1414 = vadd.f32 %v1305, %v1307
      %1415 = vadd.xlane.f32.xlu0 %v1414
      %v1416 = vpop.xlane.xlu0 %1415
      %v1417 = vadd.f32 %v1309, %v1311
      %1418 = vadd.xlane.f32.xlu0 %v1417
      %v1419 = vpop.xlane.xlu0 %1418
      %v1420 = vadd.f32 %v1313, %v1315
      %1421 = vadd.xlane.f32.xlu0 %v1420
      %v1422 = vpop.xlane.xlu0 %1421
      %v1423 = vadd.f32 %v1317, %v1319
      %1424 = vadd.xlane.f32.xlu0 %v1423
      %v1425 = vpop.xlane.xlu0 %1424
      %v1426 = vadd.f32 %v1321, %v1323
      %1427 = vadd.xlane.f32.xlu0 %v1426
      %v1428 = vpop.xlane.xlu0 %1427
      %v1429 = vadd.f32 %v1325, %v1327
      %1430 = vadd.xlane.f32.xlu0 %v1429
      %v1431 = vpop.xlane.xlu0 %1430
      %v1432 = vadd.f32 %v1329, %v1331
      %1433 = vadd.xlane.f32.xlu0 %v1432
      %v1434 = vpop.xlane.xlu0 %1433
      %v1435 = vadd.f32 %v1333, %v1335
      %1436 = vadd.xlane.f32.xlu0 %v1435
      %v1437 = vpop.xlane.xlu0 %1436
      %v1438 = vadd.f32 %v1337, %v1339
      %1439 = vadd.xlane.f32.xlu0 %v1438
      %v1440 = vpop.xlane.xlu0 %1439
      %v1441 = vadd.f32 %v1341, %v1343
      %1442 = vadd.xlane.f32.xlu0 %v1441
      %v1443 = vpop.xlane.xlu0 %1442
      %v1444 = vadd.f32 %v1345, %v1347
      %1445 = vadd.xlane.f32.xlu0 %v1444
      %v1446 = vpop.xlane.xlu0 %1445
      %v1447 = vadd.f32 %v1349, %v1351
      %1448 = vadd.xlane.f32.xlu0 %v1447
      %v1449 = vpop.xlane.xlu0 %1448
      %v1450 = vadd.f32 %v1353, %v1355
      %1451 = vadd.xlane.f32.xlu0 %v1450
      %v1452 = vpop.xlane.xlu0 %1451
      %v1453 = vadd.f32 %v1357, %v1359
      %1454 = vadd.xlane.f32.xlu0 %v1453
      %v1455 = vpop.xlane.xlu0 %1454
      %1456 = vmatprep.subr.mxu0 %v647
      %1457 = vmatpush1.xpose.msra.mxu0 %v645
      %1458 = vmatprep.subr.mxu0 %v653
      %1459 = vmatpush1.xpose.msra.mxu0 %v651
      %1460 = vmatprep.subr.mxu0 0.0
      %1461 = vmatpush1.xpose.msra.mxu0 0.0
      %1462 = vmatprep.subr.mxu0 0.0
      %1463 = vmatpush1.xpose.msra.mxu0 0.0
      %1464 = vmatprep.subr.mxu0 0.0
      %1465 = vmatpush1.xpose.msra.mxu0 0.0
      %1466 = vmatprep.subr.mxu0 0.0
      %1467 = vmatpush1.xpose.msra.mxu0 0.0
      %1468 = vmatprep.subr.mxu0 0.0
      %1469 = vmatpush1.xpose.msra.mxu0 0.0
      %1470 = vmatprep.subr.mxu0 0.0
      %1471 = vmatpush1.xpose.msra.mxu0 0.0
      %1472 = vmatprep.subr.mxu0 0.0
      %1473 = vmatpush1.xpose.msra.mxu0 0.0
      %1474 = vmatprep.subr.mxu0 0.0
      %1475 = vmatpush1.xpose.msra.mxu0 0.0
      %1476 = vmatprep.subr.mxu0 0.0
      %1477 = vmatpush1.xpose.msra.mxu0 0.0
      %1478 = vmatprep.subr.mxu0 0.0
      %1479 = vmatpush1.xpose.msra.mxu0 0.0
      %1480 = vmatprep.subr.mxu0 0.0
      %1481 = vmatpush1.xpose.msra.mxu0 0.0
      %1482 = vmatprep.subr.mxu0 0.0
      %1483 = vmatpush1.xpose.msra.mxu0 0.0
      %1484 = vmatprep.subr.mxu0 0.0
      %1485 = vmatpush1.xpose.msra.mxu0 0.0
      %1486 = vmatprep.subr.mxu0 0.0
      %1487 = vmatpush1.xpose.msra.mxu0 0.0
      %1488 = vmatprep.subr.mxu0 0.0
      %1489 = vmatpush1.xpose.msra.mxu0 0.0
      %1490 = vmatprep.subr.mxu0 0.0
      %1491 = vmatpush1.xpose.msra.mxu0 0.0
      %1492 = vmatprep.subr.mxu0 0.0
      %1493 = vmatpush1.xpose.msra.mxu0 0.0
      %1494 = vmatprep.subr.mxu0 0.0
      %1495 = vmatpush1.xpose.msra.mxu0 0.0
      %1496 = vmatprep.subr.mxu0 0.0
      %1497 = vmatpush1.xpose.msra.mxu0 0.0
      %1498 = vmatprep.subr.mxu0 0.0
      %1499 = vmatpush1.xpose.msra.mxu0 0.0
      %1500 = vmatprep.subr.mxu0 0.0
      %1501 = vmatpush1.xpose.msra.mxu0 0.0
      %1502 = vmatprep.subr.mxu0 0.0
      %1503 = vmatpush1.xpose.msra.mxu0 0.0
      %1504 = vmatprep.subr.mxu0 0.0
      %1505 = vmatpush1.xpose.msra.mxu0 0.0
      %1506 = vmatprep.subr.mxu0 0.0
      %1507 = vmatpush1.xpose.msra.mxu0 0.0
      %1508 = vmatprep.subr.mxu0 0.0
      %1509 = vmatpush1.xpose.msra.mxu0 0.0
      %1510 = vmatprep.subr.mxu0 0.0
      %1511 = vmatpush1.xpose.msra.mxu0 0.0
      %1512 = vmatprep.subr.mxu0 0.0
      %1513 = vmatpush1.xpose.msra.mxu0 0.0
      %1514 = vmatprep.subr.mxu0 0.0
      %1515 = vmatpush1.xpose.msra.mxu0 0.0
      %1516 = vmatprep.subr.mxu0 0.0
      %1517 = vmatpush1.xpose.msra.mxu0 0.0
      %1518 = vmatprep.subr.mxu0 0.0
      %1519 = vmatpush1.xpose.msra.mxu0 0.0
      %1520 = vmatprep.mubr.f32.mxu0 %v1235
      %1521 = vmatmul.mubr.f32.gmra.mrb[0].mxu0 %v1233
      %v1522 = vpop.f32.mrb[0].mxu0
      %v1523 = vadd.f32 0.0, %v1522
      %v1524 = vpop.f32.mrb[0].mxu0
      %1525 = vmatprep.mubr.f32.mxu0 %v1239
      %1526 = vmatmul.mubr.f32.gmra.mrb[0].mxu0 %v1237
      %v1527 = vpop.f32.mrb[0].mxu0
      %v1528 = vadd.f32 0.0, %v1527
      %v1529 = vpop.f32.mrb[0].mxu0
      %1530 = vmatprep.mubr.f32.mxu0 %v1243
      %1531 = vmatmul.mubr.f32.gmra.mrb[0].mxu0 %v1241
      %v1532 = vpop.f32.mrb[0].mxu0
      %v1533 = vadd.f32 0.0, %v1532
      %v1534 = vpop.f32.mrb[0].mxu0
      %1535 = vmatprep.mubr.f32.mxu0 %v1247
      %1536 = vmatmul.mubr.f32.gmra.mrb[0].mxu0 %v1245
      %v1537 = vpop.f32.mrb[0].mxu0
      %v1538 = vadd.f32 0.0, %v1537
      %v1539 = vpop.f32.mrb[0].mxu0
      %1540 = vmatprep.mubr.f32.mxu0 %v1251
      %1541 = vmatmul.mubr.f32.gmra.mrb[0].mxu0 %v1249
      %v1542 = vpop.f32.mrb[0].mxu0
      %v1543 = vadd.f32 0.0, %v1542
      %v1544 = vpop.f32.mrb[0].mxu0
      %1545 = vmatprep.mubr.f32.mxu0 %v1255
      %1546 = vmatmul.mubr.f32.gmra.mrb[0].mxu0 %v1253
      %v1547 = vpop.f32.mrb[0].mxu0
      %v1548 = vadd.f32 0.0, %v1547
      %v1549 = vpop.f32.mrb[0].mxu0
      %1550 = vmatprep.mubr.f32.mxu0 %v1259
      %1551 = vmatmul.mubr.f32.gmra.mrb[0].mxu0 %v1257
      %v1552 = vpop.f32.mrb[0].mxu0
      %v1553 = vadd.f32 0.0, %v1552
      %v1554 = vpop.f32.mrb[0].mxu0
      %1555 = vmatprep.mubr.f32.mxu0 %v1263
      %1556 = vmatmul.mubr.f32.gmra.mrb[0].mxu0 %v1261
      %v1557 = vpop.f32.mrb[0].mxu0
      %v1558 = vadd.f32 0.0, %v1557
      %v1559 = vpop.f32.mrb[0].mxu0
      %1560 = vmatprep.mubr.f32.mxu0 %v1267
      %1561 = vmatmul.mubr.f32.gmra.mrb[0].mxu0 %v1265
      %v1562 = vpop.f32.mrb[0].mxu0
      %v1563 = vadd.f32 0.0, %v1562
      %v1564 = vpop.f32.mrb[0].mxu0
      %1565 = vmatprep.mubr.f32.mxu0 %v1271
      %1566 = vmatmul.mubr.f32.gmra.mrb[0].mxu0 %v1269
      %v1567 = vpop.f32.mrb[0].mxu0
      %v1568 = vadd.f32 0.0, %v1567
      %v1569 = vpop.f32.mrb[0].mxu0
      %1570 = vmatprep.mubr.f32.mxu0 %v1275
      %1571 = vmatmul.mubr.f32.gmra.mrb[0].mxu0 %v1273
      %v1572 = vpop.f32.mrb[0].mxu0
      %v1573 = vadd.f32 0.0, %v1572
      %v1574 = vpop.f32.mrb[0].mxu0
      %1575 = vmatprep.mubr.f32.mxu0 %v1279
      %1576 = vmatmul.mubr.f32.gmra.mrb[0].mxu0 %v1277
      %v1577 = vpop.f32.mrb[0].mxu0
      %v1578 = vadd.f32 0.0, %v1577
      %v1579 = vpop.f32.mrb[0].mxu0
      %1580 = vmatprep.mubr.f32.mxu0 %v1283
      %1581 = vmatmul.mubr.f32.gmra.mrb[0].mxu0 %v1281
      %v1582 = vpop.f32.mrb[0].mxu0
      %v1583 = vadd.f32 0.0, %v1582
      %v1584 = vpop.f32.mrb[0].mxu0
      %1585 = vmatprep.mubr.f32.mxu0 %v1287
      %1586 = vmatmul.mubr.f32.gmra.mrb[0].mxu0 %v1285
      %v1587 = vpop.f32.mrb[0].mxu0
      %v1588 = vadd.f32 0.0, %v1587
      %v1589 = vpop.f32.mrb[0].mxu0
      %1590 = vmatprep.mubr.f32.mxu0 %v1291
      %1591 = vmatmul.mubr.f32.gmra.mrb[0].mxu0 %v1289
      %v1592 = vpop.f32.mrb[0].mxu0
      %v1593 = vadd.f32 0.0, %v1592
      %v1594 = vpop.f32.mrb[0].mxu0
      %1595 = vmatprep.mubr.f32.mxu0 %v1295
      %1596 = vmatmul.mubr.f32.gmra.mrb[0].mxu0 %v1293
      %v1597 = vpop.f32.mrb[0].mxu0
      %v1598 = vadd.f32 0.0, %v1597
      %v1599 = vpop.f32.mrb[0].mxu0
      %1600 = vmatprep.mubr.f32.mxu0 %v1299
      %1601 = vmatmul.mubr.f32.gmra.mrb[0].mxu0 %v1297
      %v1602 = vpop.f32.mrb[0].mxu0
      %v1603 = vadd.f32 0.0, %v1602
      %v1604 = vpop.f32.mrb[0].mxu0
      %1605 = vmatprep.mubr.f32.mxu0 %v1303
      %1606 = vmatmul.mubr.f32.gmra.mrb[0].mxu0 %v1301
      %v1607 = vpop.f32.mrb[0].mxu0
      %v1608 = vadd.f32 0.0, %v1607
      %v1609 = vpop.f32.mrb[0].mxu0
      %1610 = vmatprep.mubr.f32.mxu0 %v1307
      %1611 = vmatmul.mubr.f32.gmra.mrb[0].mxu0 %v1305
      %v1612 = vpop.f32.mrb[0].mxu0
      %v1613 = vadd.f32 0.0, %v1612
      %v1614 = vpop.f32.mrb[0].mxu0
      %1615 = vmatprep.mubr.f32.mxu0 %v1311
      %1616 = vmatmul.mubr.f32.gmra.mrb[0].mxu0 %v1309
      %v1617 = vpop.f32.mrb[0].mxu0
      %v1618 = vadd.f32 0.0, %v1617
      %v1619 = vpop.f32.mrb[0].mxu0
      %1620 = vmatprep.mubr.f32.mxu0 %v1315
      %1621 = vmatmul.mubr.f32.gmra.mrb[0].mxu0 %v1313
      %v1622 = vpop.f32.mrb[0].mxu0
      %v1623 = vadd.f32 0.0, %v1622
      %v1624 = vpop.f32.mrb[0].mxu0
      %1625 = vmatprep.mubr.f32.mxu0 %v1319
      %1626 = vmatmul.mubr.f32.gmra.mrb[0].mxu0 %v1317
      %v1627 = vpop.f32.mrb[0].mxu0
      %v1628 = vadd.f32 0.0, %v1627
      %v1629 = vpop.f32.mrb[0].mxu0
      %1630 = vmatprep.mubr.f32.mxu0 %v1323
      %1631 = vmatmul.mubr.f32.gmra.mrb[0].mxu0 %v1321
      %v1632 = vpop.f32.mrb[0].mxu0
      %v1633 = vadd.f32 0.0, %v1632
      %v1634 = vpop.f32.mrb[0].mxu0
      %1635 = vmatprep.mubr.f32.mxu0 %v1327
      %1636 = vmatmul.mubr.f32.gmra.mrb[0].mxu0 %v1325
      %v1637 = vpop.f32.mrb[0].mxu0
      %v1638 = vadd.f32 0.0, %v1637
      %v1639 = vpop.f32.mrb[0].mxu0
      %1640 = vmatprep.mubr.f32.mxu0 %v1331
      %1641 = vmatmul.mubr.f32.gmra.mrb[0].mxu0 %v1329
      %v1642 = vpop.f32.mrb[0].mxu0
      %v1643 = vadd.f32 0.0, %v1642
      %v1644 = vpop.f32.mrb[0].mxu0
      %1645 = vmatprep.mubr.f32.mxu0 %v1335
      %1646 = vmatmul.mubr.f32.gmra.mrb[0].mxu0 %v1333
      %v1647 = vpop.f32.mrb[0].mxu0
      %v1648 = vadd.f32 0.0, %v1647
      %v1649 = vpop.f32.mrb[0].mxu0
      %1650 = vmatprep.mubr.f32.mxu0 %v1339
      %1651 = vmatmul.mubr.f32.gmra.mrb[0].mxu0 %v1337
      %v1652 = vpop.f32.mrb[0].mxu0
      %v1653 = vadd.f32 0.0, %v1652
      %v1654 = vpop.f32.mrb[0].mxu0
      %1655 = vmatprep.mubr.f32.mxu0 %v1343
      %1656 = vmatmul.mubr.f32.gmra.mrb[0].mxu0 %v1341
      %v1657 = vpop.f32.mrb[0].mxu0
      %v1658 = vadd.f32 0.0, %v1657
      %v1659 = vpop.f32.mrb[0].mxu0
      %1660 = vmatprep.mubr.f32.mxu0 %v1347
      %1661 = vmatmul.mubr.f32.gmra.mrb[0].mxu0 %v1345
      %v1662 = vpop.f32.mrb[0].mxu0
      %v1663 = vadd.f32 0.0, %v1662
      %v1664 = vpop.f32.mrb[0].mxu0
      %1665 = vmatprep.mubr.f32.mxu0 %v1351
      %1666 = vmatmul.mubr.f32.gmra.mrb[0].mxu0 %v1349
      %v1667 = vpop.f32.mrb[0].mxu0
      %v1668 = vadd.f32 0.0, %v1667
      %v1669 = vpop.f32.mrb[0].mxu0
      %1670 = vmatprep.mubr.f32.mxu0 %v1355
      %1671 = vmatmul.mubr.f32.gmra.mrb[0].mxu0 %v1353
      %v1672 = vpop.f32.mrb[0].mxu0
      %v1673 = vadd.f32 0.0, %v1672
      %v1674 = vpop.f32.mrb[0].mxu0
      %1675 = vmatprep.mubr.f32.mxu0 %v1359
      %1676 = vmatmul.mubr.f32.gmra.mrb[0].mxu0 %v1357
      %v1677 = vpop.f32.mrb[0].mxu0
      %v1678 = vadd.f32 0.0, %v1677
      %v1679 = vpop.f32.mrb[0].mxu0
      %1680 = vdwg.mxu0
      %v1681 = vrcp.pop %v1362
      %v1682 = vrcp.pop %v1365
      %v1683 = vrcp.pop %v1368
      %v1684 = vrcp.pop %v1371
      %v1685 = vrcp.pop %v1374
      %v1686 = vrcp.pop %v1377
      %v1687 = vrcp.pop %v1380
      %v1688 = vrcp.pop %v1383
      %v1689 = vrcp.pop %v1386
      %v1690 = vrcp.pop %v1389
      %v1691 = vrcp.pop %v1392
      %v1692 = vrcp.pop %v1395
      %v1693 = vrcp.pop %v1398
      %v1694 = vrcp.pop %v1401
      %v1695 = vrcp.pop %v1404
      %v1696 = vrcp.pop %v1407
      %v1697 = vrcp.pop %v1410
      %v1698 = vrcp.pop %v1413
      %v1699 = vrcp.pop %v1416
      %v1700 = vrcp.pop %v1419
      %v1701 = vrcp.pop %v1422
      %v1702 = vrcp.pop %v1425
      %v1703 = vrcp.pop %v1428
      %v1704 = vrcp.pop %v1431
      %v1705 = vrcp.pop %v1434
      %v1706 = vrcp.pop %v1437
      %v1707 = vrcp.pop %v1440
      %v1708 = vrcp.pop %v1443
      %v1709 = vrcp.pop %v1446
      %v1710 = vrcp.pop %v1449
      %v1711 = vrcp.pop %v1452
      %v1712 = vrcp.pop %v1455
      %v1713 = vmul.f32 %v1523, %v1681
      %v1714 = vmul.f32 %v1528, %v1682
      %v1715 = vmul.f32 %v1533, %v1683
      %v1716 = vmul.f32 %v1538, %v1684
      %v1717 = vmul.f32 %v1543, %v1685
      %v1718 = vmul.f32 %v1548, %v1686
      %v1719 = vmul.f32 %v1553, %v1687
      %v1720 = vmul.f32 %v1558, %v1688
      %v1721 = vmul.f32 %v1563, %v1689
      %v1722 = vmul.f32 %v1568, %v1690
      %v1723 = vmul.f32 %v1573, %v1691
      %v1724 = vmul.f32 %v1578, %v1692
      %v1725 = vmul.f32 %v1583, %v1693
      %v1726 = vmul.f32 %v1588, %v1694
      %v1727 = vmul.f32 %v1593, %v1695
      %v1728 = vmul.f32 %v1598, %v1696
      %v1729 = vmul.f32 %v1603, %v1697
      %v1730 = vmul.f32 %v1608, %v1698
      %v1731 = vmul.f32 %v1613, %v1699
      %v1732 = vmul.f32 %v1618, %v1700
      %v1733 = vmul.f32 %v1623, %v1701
      %v1734 = vmul.f32 %v1628, %v1702
      %v1735 = vmul.f32 %v1633, %v1703
      %v1736 = vmul.f32 %v1638, %v1704
      %v1737 = vmul.f32 %v1643, %v1705
      %v1738 = vmul.f32 %v1648, %v1706
      %v1739 = vmul.f32 %v1653, %v1707
      %v1740 = vmul.f32 %v1658, %v1708
      %v1741 = vmul.f32 %v1663, %v1709
      %v1742 = vmul.f32 %v1668, %v1710
      %v1743 = vmul.f32 %v1673, %v1711
      %v1744 = vmul.f32 %v1678, %v1712
      %v1745 = vld [vmem:[%s6] sm:$0xff]
      %v1746 = vld [vmem:[%s6 + $0x8] sm:$0xff]
      %v1747 = vld [vmem:[%s7] sm:$0xff]
      %v1748 = vld [vmem:[%s7 + $0x8] sm:$0xff]
      %1750 = vset.pattern.permute.xlu0 0
      %1751 = vperm.xlu0 %1750, %v1747
      %v1752 = vpop.permute.xlu0 %1751
      %1755 = vset.pattern.permute.xlu0 0
      %1756 = vperm.xlu0 %1755, %v1748
      %v1757 = vpop.permute.xlu0 %1756
      %v1760 = vsel %vm331, %v1745, 0
      %v1763 = vsel %vm331, %v1746, 0
      %v1766 = vsel %vm331, %v1713, 0
      %v1769 = vsel %vm331, %v1714, 0
      %v1772 = vsel %vm331, %v1715, 0
      %v1775 = vsel %vm331, %v1716, 0
      %v1778 = vsel %vm331, %v1717, 0
      %v1781 = vsel %vm331, %v1718, 0
      %v1784 = vsel %vm331, %v1719, 0
      %v1787 = vsel %vm331, %v1720, 0
      %v1790 = vsel %vm331, %v1721, 0
      %v1793 = vsel %vm331, %v1722, 0
      %v1796 = vsel %vm331, %v1723, 0
      %v1799 = vsel %vm331, %v1724, 0
      %v1802 = vsel %vm331, %v1725, 0
      %v1805 = vsel %vm331, %v1726, 0
      %v1808 = vsel %vm331, %v1727, 0
      %v1811 = vsel %vm331, %v1728, 0
      %v1814 = vsel %vm331, %v1729, 0
      %v1817 = vsel %vm331, %v1730, 0
      %v1820 = vsel %vm331, %v1731, 0
      %v1823 = vsel %vm331, %v1732, 0
      %v1826 = vsel %vm331, %v1733, 0
      %v1829 = vsel %vm331, %v1734, 0
      %v1832 = vsel %vm331, %v1735, 0
      %v1835 = vsel %vm331, %v1736, 0
      %v1838 = vsel %vm331, %v1737, 0
      %v1841 = vsel %vm331, %v1738, 0
      %v1844 = vsel %vm331, %v1739, 0
      %v1847 = vsel %vm331, %v1740, 0
      %v1850 = vsel %vm331, %v1741, 0
      %v1853 = vsel %vm331, %v1742, 0
      %v1856 = vsel %vm331, %v1743, 0
      %v1859 = vsel %vm331, %v1744, 0
      %1861 = vmatprep.subr.mxu0 0.0
      %1862 = vmatpush1.xpose.msra.mxu0 %v1766
      %1863 = vmatprep.subr.mxu0 0.0
      %1864 = vmatpush1.xpose.msra.mxu0 %v1769
      %1865 = vmatprep.subr.mxu0 0.0
      %1866 = vmatpush1.xpose.msra.mxu0 %v1772
      %1867 = vmatprep.subr.mxu0 0.0
      %1868 = vmatpush1.xpose.msra.mxu0 %v1775
      %1869 = vmatprep.subr.mxu0 0.0
      %1870 = vmatpush1.xpose.msra.mxu0 %v1778
      %1871 = vmatprep.subr.mxu0 0.0
      %1872 = vmatpush1.xpose.msra.mxu0 %v1781
      %1873 = vmatprep.subr.mxu0 0.0
      %1874 = vmatpush1.xpose.msra.mxu0 %v1784
      %1875 = vmatprep.subr.mxu0 0.0
      %1876 = vmatpush1.xpose.msra.mxu0 %v1787
      %1877 = vmatprep.subr.mxu0 0.0
      %1878 = vmatpush1.xpose.msra.mxu0 %v1790
      %1879 = vmatprep.subr.mxu0 0.0
      %1880 = vmatpush1.xpose.msra.mxu0 %v1793
      %1881 = vmatprep.subr.mxu0 0.0
      %1882 = vmatpush1.xpose.msra.mxu0 %v1796
      %1883 = vmatprep.subr.mxu0 0.0
      %1884 = vmatpush1.xpose.msra.mxu0 %v1799
      %1885 = vmatprep.subr.mxu0 0.0
      %1886 = vmatpush1.xpose.msra.mxu0 %v1802
      %1887 = vmatprep.subr.mxu0 0.0
      %1888 = vmatpush1.xpose.msra.mxu0 %v1805
      %1889 = vmatprep.subr.mxu0 0.0
      %1890 = vmatpush1.xpose.msra.mxu0 %v1808
      %1891 = vmatprep.subr.mxu0 0.0
      %1892 = vmatpush1.xpose.msra.mxu0 %v1811
      %1893 = vmatprep.subr.mxu0 0.0
      %1894 = vmatpush1.xpose.msra.mxu0 %v1814
      %1895 = vmatprep.subr.mxu0 0.0
      %1896 = vmatpush1.xpose.msra.mxu0 %v1817
      %1897 = vmatprep.subr.mxu0 0.0
      %1898 = vmatpush1.xpose.msra.mxu0 %v1820
      %1899 = vmatprep.subr.mxu0 0.0
      %1900 = vmatpush1.xpose.msra.mxu0 %v1823
      %1901 = vmatprep.subr.mxu0 0.0
      %1902 = vmatpush1.xpose.msra.mxu0 %v1826
      %1903 = vmatprep.subr.mxu0 0.0
      %1904 = vmatpush1.xpose.msra.mxu0 %v1829
      %1905 = vmatprep.subr.mxu0 0.0
      %1906 = vmatpush1.xpose.msra.mxu0 %v1832
      %1907 = vmatprep.subr.mxu0 0.0
      %1908 = vmatpush1.xpose.msra.mxu0 %v1835
      %1909 = vmatprep.subr.mxu0 0.0
      %1910 = vmatpush1.xpose.msra.mxu0 %v1838
      %1911 = vmatprep.subr.mxu0 0.0
      %1912 = vmatpush1.xpose.msra.mxu0 %v1841
      %1913 = vmatprep.subr.mxu0 0.0
      %1914 = vmatpush1.xpose.msra.mxu0 %v1844
      %1915 = vmatprep.subr.mxu0 0.0
      %1916 = vmatpush1.xpose.msra.mxu0 %v1847
      %1917 = vmatprep.subr.mxu0 0.0
      %1918 = vmatpush1.xpose.msra.mxu0 %v1850
      %1919 = vmatprep.subr.mxu0 0.0
      %1920 = vmatpush1.xpose.msra.mxu0 %v1853
      %1921 = vmatprep.subr.mxu0 0.0
      %1922 = vmatpush1.xpose.msra.mxu0 %v1856
      %1923 = vmatprep.subr.mxu0 0.0
      %1924 = vmatpush1.xpose.msra.mxu0 %v1859
      %1925 = vmatprep.mubr.f32.mxu0 0.0
      %1926 = vmatmul.mubr.f32.gmra.mrb[0].mxu0 %v1760
      %v1927 = vpop.f32.mrb[0].mxu0
      %v1928 = vadd.f32 %v1752, %v1927
      %v1929 = vpop.f32.mrb[0].mxu0
      %v1930 = vadd.f32 %v1752, %v1929
      %1931 = vmatprep.mubr.f32.mxu0 0.0
      %1932 = vmatmul.mubr.f32.gmra.mrb[0].mxu0 %v1763
      %v1933 = vpop.f32.mrb[0].mxu0
      %v1934 = vadd.f32 %v1757, %v1933
      %v1935 = vpop.f32.mrb[0].mxu0
      %v1936 = vadd.f32 %v1757, %v1935
      %1937 = vdwg.mxu0
      %v1938 = vadd.f32 %v306, %v1928
      %v1939 = vadd.f32 %v307, %v1930
      %v1940 = vadd.f32 %v308, %v1934
      %v1941 = vadd.f32 %v309, %v1936
      %1942 = vst [vmem:[%s305] sm:$0xff] %v1938
      %1943 = vst [vmem:[%s305 + $0x8] sm:$0xff] %v1939
      %1944 = vst [vmem:[%s305 + $0x10] sm:$0xff] %v1940
      %1945 = vst [vmem:[%s305 + $0x18] sm:$0xff] %v1941
      %p1946 = scmp.lt.s32.totalorder %s19, 1
      %s1947 = scalar_select %p1946, %s19, 1
      %s1948 = smul.addr %s1947, 4
      %s1949 = smul.addr %s1948, 8
      %s1950 = scalar_lea.vmem %s8, %s1949
      // Predicated region
      $region53: #{attn_block_forward.1} parent=51 // pred_check
        %p1951 = pneg %p210
      $region54: #{attn_block_forward.1} parent=51 // pred_check_branch
        %1953 = sbr.rel (%p1951) target = $region56
      $region55: #{attn_block_forward.1} parent=51 // pred_region
        _
      $region56: #{attn_block_forward.1} parent=51 // pred_fallthru
        _
    $region52: #{attn_block_forward.1} parent=5 // pred_fallthru
      _
    %p1954 = scmp.le.s32.totalorder 2, %s14
    // Predicated region
    $region57: #{attn_block_forward.1} parent=5 // pred_check
      %p1955 = pneg %p1954
    $region58: #{attn_block_forward.1} parent=5 // pred_check_branch
      %1957 = sbr.rel (%p1955) target = $region60
    $region59: #{attn_block_forward.1} parent=5 // pred_region
      %s1958 = ssub.s32 %s14, 2
      // Predicated region
      $region61: #{attn_block_forward.1} parent=59 // pred_check
        %p1959 = pneg %p216
      $region62: #{attn_block_forward.1} parent=59 // pred_check_branch
        %1961 = sbr.rel (%p1959) target = $region64
      $region63: #{attn_block_forward.1} parent=59 // pred_region
        %p1962 = scmp.lt.s32.totalorder %s20, 1
        %s1963 = scalar_select %p1962, %s20, 1
        %s1964 = smul.addr %s1963, 4
        %s1965 = smul.addr %s1964, 8
        %s1966 = scalar_lea.vmem %s8, %s1965
      $region64: #{attn_block_forward.1} parent=59 // pred_fallthru
        _
    $region60: #{attn_block_forward.1} parent=5 // pred_fallthru
      _
  $region6: #{attn_block_forward.1} parent=0 // loop_footer
    %s18 = sadd.s32 1, %s14
  $region7: #{attn_block_forward.1} parent=0 // loop_footer_branch
    %13 = sbr.rel target = $region3
  $region8: #{attn_block_forward.1} parent=0 // loop_exit
    _

</llo_original>
